<compile_context>
chip_gen: v6e
topology: v6e:2x2x1
jax: 0.10.0
libtpu: 0.0.40
codegen_flags: <defaults>
</compile_context>

<pallas_src>
import jax
import jax.numpy as jnp
from jax.experimental import pallas as pl
from jax.experimental.pallas import tpu as pltpu


def _round_up(x, m):
    return ((x + m - 1) // m) * m


def _pick_k_tile(dim):
    for cand in (512, 256, 128):
        if dim % cand == 0:
            return cand
    return dim


def _nbytes(shape, dtype):
    n = 1
    for d in shape:
        n *= int(d)
    return n * jnp.dtype(dtype).itemsize


def mega_model_kernel(
    tok_ref,      # [bt, S]      int32 token ids
    img_ref,      # [bt, tk]     bf16  flattened image activations (K tile)
    wimg_ref,     # [tk, H_p]    bf16  image_model linear (K tile)
    bimg_ref,     # [1, H_p]     f32
    embw_ref,     # [Vp, H_p]    bf16  pre-folded embedding @ w_txt
    btxt_ref,     # [1, H_p]     f32
    w1_ref,       # [H_p, 512]   bf16  head layer 1 (500 -> 512)
    b1_ref,       # [1, 512]     f32
    w2_ref,       # [512, 256]   bf16  head layer 2 (200 -> 256)
    b2_ref,       # [1, 256]     f32
    w3_ref,       # [256, 128]   bf16  head layer 3 (2 logits in lanes 0..1)
    b3_ref,       # [1, 128]     f32
    out_ref,      # [bt, 128]    f32
    acc_ref,      # [bt, H_p]    f32  image-feature accumulator (scratch)
):
    k = pl.program_id(1)
    nk = pl.num_programs(1)

    # ---- image path: K-tiled contraction, f32 accumulation in VMEM scratch ----
    @pl.when(k == 0)
    def _():
        acc_ref[...] = jnp.zeros_like(acc_ref)

    acc_ref[...] += jnp.dot(
        img_ref[...], wimg_ref[...], preferred_element_type=jnp.float32
    )

    # ---- text path + elementwise fuse + classification head on the last K step ----
    @pl.when(k == nk - 1)
    def _():
        bt, S = tok_ref.shape
        Vp = embw_ref.shape[0]

        # token counts on a single [bt, Vp] tile: S cheap VPU compare+adds
        # (no [bt, S, Vp] one-hot, no cross-sublane reduce).
        tok = tok_ref[...]
        iota_v = jax.lax.broadcasted_iota(jnp.int32, (bt, Vp), 1)
        counts = jnp.zeros((bt, Vp), jnp.float32)
        for s in range(S):  # S is small & static
            counts = counts + (tok[:, s:s + 1] == iota_v).astype(jnp.float32)

        # mean-pooled embedding @ w_txt in one bf16 MXU matmul against the
        # pre-folded [Vp, H_p] table; 1/S mean scale applied post-dot.
        # TODO(synk): for realistic vocab sizes (V >> few hundred) switch to a
        # scalar-prefetched row-gather DMA of S embedding rows instead of counts@table.
        txt_feat = (
            jnp.dot(counts.astype(jnp.bfloat16), embw_ref[...],
                    preferred_element_type=jnp.float32) * (1.0 / S)
            + btxt_ref[...]
        )

        img_feat = acc_ref[...] + bimg_ref[...]

        # x = image * question  (elementwise aggregation, f32)
        x = img_feat * txt_feat

        # head: Linear -> Dropout(identity) -> ReLU -> Linear -> Dropout -> ReLU -> Linear
        h1 = jnp.dot(x.astype(jnp.bfloat16), w1_ref[...],
                     preferred_element_type=jnp.float32) + b1_ref[...]
        h1 = jnp.maximum(h1, 0.0)

        h2 = jnp.dot(h1.astype(jnp.bfloat16), w2_ref[...],
                     preferred_element_type=jnp.float32) + b2_ref[...]
        h2 = jnp.maximum(h2, 0.0)

        out = jnp.dot(h2.astype(jnp.bfloat16), w3_ref[...],
                      preferred_element_type=jnp.float32) + b3_ref[...]
        out_ref[...] = out.astype(out_ref.dtype)


def mega_model_forward(images, tokens, params, *, batch_tile=256):
    """images: [B, C, Hs, Ws] float32 (NCHW).  tokens: [B, S] int32 token ids."""
    B = images.shape[0]
    S = tokens.shape[1]

    cin_p, h_p = params["w_img"].shape

    # batch: >= 16 rows (full bf16 sublane group); tile across the grid when large
    Bp = _round_up(max(B, 16), 16)
    bt = min(Bp, batch_tile)
    Bp = _round_up(Bp, bt)
    nb = Bp // bt

    # K tiling over the flattened image features
    tk = _pick_k_tile(cin_p)
    nk = cin_p // tk

    # single bf16 cast; pad only when the shape demands it
    img_flat = images.reshape(B, -1).astype(jnp.bfloat16)
    pad_b, pad_c = Bp - B, cin_p - img_flat.shape[1]
    if pad_b or pad_c:
        img_flat = jnp.pad(img_flat, ((0, pad_b), (0, pad_c)))
    tok_pad = tokens.astype(jnp.int32)
    if pad_b:
        tok_pad = jnp.pad(tok_pad, ((0, pad_b), (0, 0)))

    operands = (
        tok_pad, img_flat,
        params["w_img"], params["b_img"],
        params["emb_w_txt"], params["b_txt"],
        params["w1"], params["b1"],
        params["w2"], params["b2"],
        params["w3"], params["b3"],
    )

    const = lambda i, k: (0, 0)
    block_shapes = [
        (bt, S),                        # tokens
        (bt, tk),                       # image activations (K tile)
        (tk, h_p),                      # w_img (K tile)
        (1, h_p),                       # b_img
        params["emb_w_txt"].shape,      # fused emb @ w_txt
        (1, h_p),                       # b_txt
        params["w1"].shape, params["b1"].shape,
        params["w2"].shape, params["b2"].shape,
        params["w3"].shape, params["b3"].shape,
    ]
    in_specs = [
        pl.BlockSpec((bt, S), lambda i, k: (i, 0)),
        pl.BlockSpec((bt, tk), lambda i, k: (i, k)),
        pl.BlockSpec((tk, h_p), lambda i, k: (k, 0)),
        pl.BlockSpec((1, h_p), const),
        pl.BlockSpec(params["emb_w_txt"].shape, const),
        pl.BlockSpec((1, h_p), const),
        pl.BlockSpec(params["w1"].shape, const),
        pl.BlockSpec(params["b1"].shape, const),
        pl.BlockSpec(params["w2"].shape, const),
        pl.BlockSpec(params["b2"].shape, const),
        pl.BlockSpec(params["w3"].shape, const),
        pl.BlockSpec(params["b3"].shape, const),
    ]
    out_spec = pl.BlockSpec((bt, 128), lambda i, k: (i, 0))

    # VMEM budget derived per generation (double-buffered blocks + scratch + headroom)
    try:
        vmem_cap = int(pltpu.get_tpu_info().vmem_capacity_bytes)
    except Exception:
        vmem_cap = 128 << 20
    resident = sum(2 * _nbytes(s, o.dtype) for s, o in zip(block_shapes, operands))
    resident += 2 * _nbytes((bt, 128), jnp.float32)       # output block
    resident += _nbytes((bt, h_p), jnp.float32)           # accumulator scratch
    vmem_limit = int(min(max(resident + (4 << 20), 16 << 20), 0.75 * vmem_cap))

    out = pl.pallas_call(
        mega_model_kernel,
        out_shape=jax.ShapeDtypeStruct((Bp, 128), jnp.float32),
        grid_spec=pltpu.PrefetchScalarGridSpec(
            num_scalar_prefetch=0,
            grid=(nb, nk),
            in_specs=in_specs,
            out_specs=out_spec,
            scratch_shapes=[pltpu.VMEM((bt, h_p), jnp.float32)],
        ),
        compiler_params=pltpu.CompilerParams(
            dimension_semantics=("parallel", "arbitrary"),
            vmem_limit_bytes=vmem_limit,
        ),
    )(*operands)

    # unpad: real batch rows, logits in the first 2 lanes
    return out[:B, :2]


def init_params(key, c_in_flat, embed_dim, num_hidden, vocab_size):
    ks = jax.random.split(key, 9)
    scale = 0.02
    cin_p = _round_up(c_in_flat, 256)     # 256-aligned for v6e/v7x 256-wide MXU
    h_p = _round_up(num_hidden, 256)
    v_p = _round_up(vocab_size, 128)

    def pad_to(w, rows, cols):
        return jnp.pad(w, ((0, rows - w.shape[0]), (0, cols - w.shape[1])))

    # logical (unpadded) parameters of the reference model
    emb = scale * jax.random.normal(ks[0], (vocab_size, embed_dim), jnp.float32)
    w_img = scale * jax.random.normal(ks[1], (c_in_flat, num_hidden), jnp.float32)
    w_txt = scale * jax.random.normal(ks[2], (embed_dim, num_hidden), jnp.float32)
    w1 = scale * jax.random.normal(ks[3], (num_hidden, 500), jnp.float32)
    b1 = scale * jax.random.normal(ks[4], (1, 500), jnp.float32)
    w2 = scale * jax.random.normal(ks[5], (500, 200), jnp.float32)
    b2 = scale * jax.random.normal(ks[6], (1, 200), jnp.float32)
    w3 = scale * jax.random.normal(ks[7], (200, 2), jnp.float32)
    b3 = scale * jax.random.normal(ks[8], (1, 2), jnp.float32)

    # pre-folded bf16 text table: embedding @ w_txt (1/S mean scale applied in-kernel).
    # Padded rows/cols are zero, so out-of-vocab / padded lanes are inert.
    emb_w_txt = pad_to(emb @ w_txt, v_p, h_p).astype(jnp.bfloat16)

    return {
        "emb_w_txt": emb_w_txt,
        "w_img": pad_to(w_img, cin_p, h_p).astype(jnp.bfloat16),
        "b_img": jnp.zeros((1, h_p), jnp.float32),
        "w_txt_logical": w_txt,            # kept for reference only
        "b_txt": jnp.zeros((1, h_p), jnp.float32),
        "w1": pad_to(w1, h_p, 512).astype(jnp.bfloat16),
        "b1": pad_to(b1, 1, 512),
        "w2": pad_to(w2, 512, 256).astype(jnp.bfloat16),
        "b2": pad_to(b2, 1, 256),
        "w3": pad_to(w3, 256, 128).astype(jnp.bfloat16),
        "b3": pad_to(b3, 1, 128),
    }


if __name__ == "__main__":
    key = jax.random.PRNGKey(0)
    k_img, k_tok, k_par = jax.random.split(key, 3)

    # small shapes consistent with the forward pass
    B, C, Hs, Ws = 2, 4, 16, 16       # images: NCHW
    S = 8                             # question token sequence length
    vocab_size, embed_dim = 32, 32
    num_hidden = 128                  # MegaModel num_hidden (small for the demo)

    images = jax.random.normal(k_img, (B, C, Hs, Ws), jnp.float32)
    tokens = jax.random.randint(k_tok, (B, S), 0, vocab_size, jnp.int32)

    params = init_params(k_par, C * Hs * Ws, embed_dim, num_hidden, vocab_size)

    out = mega_model_forward(images, tokens, params)
    out = jax.block_until_ready(out)
    assert out.shape == (B, 2) and out.dtype == jnp.float32
    assert bool(jnp.all(jnp.isfinite(out)))

    # TODO(synk): Dropout(0.2) treated as identity (eval mode); no train-mode RNG masking.
    # TODO(synk): mean-pool averages over all S positions; add a pad-token mask if the
    #             reference text model excludes padding before pooling.
    print("KERNEL_OK")
</pallas_src>

<mosaic_0001>
module attributes {stable_mosaic.version = 11 : i64} {
  func.func @mega_model_kernel(%arg0: i32, %arg1: i32, %arg2: memref<16x8xi32, #tpu.memory_space<vmem>>, %arg3: memref<16x512xbf16, #tpu.memory_space<vmem>>, %arg4: memref<512x256xbf16, #tpu.memory_space<vmem>>, %arg5: memref<1x256xf32, #tpu.memory_space<vmem>>, %arg6: memref<128x256xbf16, #tpu.memory_space<vmem>>, %arg7: memref<1x256xf32, #tpu.memory_space<vmem>>, %arg8: memref<256x512xbf16, #tpu.memory_space<vmem>>, %arg9: memref<1x512xf32, #tpu.memory_space<vmem>>, %arg10: memref<512x256xbf16, #tpu.memory_space<vmem>>, %arg11: memref<1x256xf32, #tpu.memory_space<vmem>>, %arg12: memref<256x128xbf16, #tpu.memory_space<vmem>>, %arg13: memref<1x128xf32, #tpu.memory_space<vmem>>, %arg14: memref<16x128xf32, #tpu.memory_space<vmem>>, %arg15: memref<16x256xf32, #tpu.memory_space<vmem>>) attributes {dimension_semantics = [#tpu.dimension_semantics<parallel>, #tpu.dimension_semantics<arbitrary>], iteration_bounds = array<i64: 1, 2>, scalar_prefetch = 0 : i64, scratch_operands = 1 : i64, tpu.core_type = #tpu.core_type<tc>, window_params = [{transform_indices = @transform_0, window_bounds = array<i64: 16, 8>}, {transform_indices = @transform_1, window_bounds = array<i64: 16, 512>}, {transform_indices = @transform_2, window_bounds = array<i64: 512, 256>}, {pipeline_mode = #tpu.pipeline_mode<synchronous>, transform_indices = @transform_3, window_bounds = array<i64: 1, 256>}, {pipeline_mode = #tpu.pipeline_mode<synchronous>, transform_indices = @transform_4, window_bounds = array<i64: 128, 256>}, {pipeline_mode = #tpu.pipeline_mode<synchronous>, transform_indices = @transform_5, window_bounds = array<i64: 1, 256>}, {pipeline_mode = #tpu.pipeline_mode<synchronous>, transform_indices = @transform_6, window_bounds = array<i64: 256, 512>}, {pipeline_mode = #tpu.pipeline_mode<synchronous>, transform_indices = @transform_7, window_bounds = array<i64: 1, 512>}, {pipeline_mode = #tpu.pipeline_mode<synchronous>, transform_indices = @transform_8, window_bounds = array<i64: 512, 256>}, {pipeline_mode = #tpu.pipeline_mode<synchronous>, transform_indices = @transform_9, window_bounds = array<i64: 1, 256>}, {pipeline_mode = #tpu.pipeline_mode<synchronous>, transform_indices = @transform_10, window_bounds = array<i64: 256, 128>}, {pipeline_mode = #tpu.pipeline_mode<synchronous>, transform_indices = @transform_11, window_bounds = array<i64: 1, 128>}, {transform_indices = @transform_12, window_bounds = array<i64: 16, 128>}]} {
    %c0_i32 = arith.constant 0 : i32
    %0 = arith.cmpi eq, %arg1, %c0_i32 : i32
    %1 = arith.extui %0 : i1 to i32
    %c0_i32_0 = arith.constant 0 : i32
    %2 = arith.cmpi ne, %1, %c0_i32_0 : i32
    scf.if %2 {
      %cst_9 = arith.constant 0.000000e+00 : f32
      %12 = vector.broadcast %cst_9 : f32 to vector<16x256xf32>
      %c0_10 = arith.constant 0 : index
      %c0_11 = arith.constant 0 : index
      %13 = vector.load %arg15[%c0_10, %c0_11] : memref<16x256xf32, #tpu.memory_space<vmem>>, vector<16x256xf32>
      tpu.vector_store %arg15[%c0_10, %c0_11], %12 {strides = array<i32>} : memref<16x256xf32, #tpu.memory_space<vmem>>, vector<16x256xf32>,
    } else {
    }
    %c0 = arith.constant 0 : index
    %c0_1 = arith.constant 0 : index
    %3 = vector.load %arg15[%c0, %c0_1] : memref<16x256xf32, #tpu.memory_space<vmem>>, vector<16x256xf32>
    %c0_2 = arith.constant 0 : index
    %c0_3 = arith.constant 0 : index
    %4 = vector.load %arg3[%c0_2, %c0_3] : memref<16x512xbf16, #tpu.memory_space<vmem>>, vector<16x512xbf16>
    %c0_4 = arith.constant 0 : index
    %c0_5 = arith.constant 0 : index
    %5 = vector.load %arg4[%c0_4, %c0_5] : memref<512x256xbf16, #tpu.memory_space<vmem>>, vector<512x256xbf16>
    %cst = arith.constant dense<0.000000e+00> : vector<16x256xf32>
    %6 = tpu.matmul %4, %5, %cst {dimension_numbers = #tpu.dot_dimension_numbers<[1], [0], [0], [1], [0, 0, 1, 1], [], []>} : vector<16x512xbf16>, vector<512x256xbf16>, vector<16x256xf32> -> vector<16x256xf32>
    %7 = arith.addf %3, %6 : vector<16x256xf32>
    %c0_6 = arith.constant 0 : index
    %c0_7 = arith.constant 0 : index
    %8 = vector.load %arg15[%c0_6, %c0_7] : memref<16x256xf32, #tpu.memory_space<vmem>>, vector<16x256xf32>
    tpu.vector_store %arg15[%c0_6, %c0_7], %7 {strides = array<i32>} : memref<16x256xf32, #tpu.memory_space<vmem>>, vector<16x256xf32>,
    %c1_i32 = arith.constant 1 : i32
    %9 = arith.cmpi eq, %arg1, %c1_i32 : i32
    %10 = arith.extui %9 : i1 to i32
    %c0_i32_8 = arith.constant 0 : i32
    %11 = arith.cmpi ne, %10, %c0_i32_8 : i32
    scf.if %11 {
      %c0_9 = arith.constant 0 : index
      %c0_10 = arith.constant 0 : index
      %12 = vector.load %arg2[%c0_9, %c0_10] : memref<16x8xi32, #tpu.memory_space<vmem>>, vector<16x8xi32>
      %13 = tpu.iota {dimensions = array<i32: 1>} : vector<16x128xi32>
      %cst_11 = arith.constant 0.000000e+00 : f32
      %14 = vector.broadcast %cst_11 : f32 to vector<16x128xf32>
      %15 = vector.extract_strided_slice %12 {offsets = [0, 0], sizes = [16, 1], strides = [1, 1]} : vector<16x8xi32> to vector<16x1xi32>
      %16 = vector.broadcast %15 : vector<16x1xi32> to vector<16x128xi32>
      %17 = arith.cmpi eq, %16, %13 : vector<16x128xi32>
      %18 = arith.extui %17 : vector<16x128xi1> to vector<16x128xi32>
      %19 = arith.sitofp %18 : vector<16x128xi32> to vector<16x128xf32>
      %20 = arith.addf %14, %19 : vector<16x128xf32>
      %21 = vector.extract_strided_slice %12 {offsets = [0, 1], sizes = [16, 1], strides = [1, 1]} : vector<16x8xi32> to vector<16x1xi32>
      %22 = vector.broadcast %21 : vector<16x1xi32> to vector<16x128xi32>
      %23 = arith.cmpi eq, %22, %13 : vector<16x128xi32>
      %24 = arith.extui %23 : vector<16x128xi1> to vector<16x128xi32>
      %25 = arith.sitofp %24 : vector<16x128xi32> to vector<16x128xf32>
      %26 = arith.addf %20, %25 : vector<16x128xf32>
      %27 = vector.extract_strided_slice %12 {offsets = [0, 2], sizes = [16, 1], strides = [1, 1]} : vector<16x8xi32> to vector<16x1xi32>
      %28 = vector.broadcast %27 : vector<16x1xi32> to vector<16x128xi32>
      %29 = arith.cmpi eq, %28, %13 : vector<16x128xi32>
      %30 = arith.extui %29 : vector<16x128xi1> to vector<16x128xi32>
      %31 = arith.sitofp %30 : vector<16x128xi32> to vector<16x128xf32>
      %32 = arith.addf %26, %31 : vector<16x128xf32>
      %33 = vector.extract_strided_slice %12 {offsets = [0, 3], sizes = [16, 1], strides = [1, 1]} : vector<16x8xi32> to vector<16x1xi32>
      %34 = vector.broadcast %33 : vector<16x1xi32> to vector<16x128xi32>
      %35 = arith.cmpi eq, %34, %13 : vector<16x128xi32>
      %36 = arith.extui %35 : vector<16x128xi1> to vector<16x128xi32>
      %37 = arith.sitofp %36 : vector<16x128xi32> to vector<16x128xf32>
      %38 = arith.addf %32, %37 : vector<16x128xf32>
      %39 = vector.extract_strided_slice %12 {offsets = [0, 4], sizes = [16, 1], strides = [1, 1]} : vector<16x8xi32> to vector<16x1xi32>
      %40 = vector.broadcast %39 : vector<16x1xi32> to vector<16x128xi32>
      %41 = arith.cmpi eq, %40, %13 : vector<16x128xi32>
      %42 = arith.extui %41 : vector<16x128xi1> to vector<16x128xi32>
      %43 = arith.sitofp %42 : vector<16x128xi32> to vector<16x128xf32>
      %44 = arith.addf %38, %43 : vector<16x128xf32>
      %45 = vector.extract_strided_slice %12 {offsets = [0, 5], sizes = [16, 1], strides = [1, 1]} : vector<16x8xi32> to vector<16x1xi32>
      %46 = vector.broadcast %45 : vector<16x1xi32> to vector<16x128xi32>
      %47 = arith.cmpi eq, %46, %13 : vector<16x128xi32>
      %48 = arith.extui %47 : vector<16x128xi1> to vector<16x128xi32>
      %49 = arith.sitofp %48 : vector<16x128xi32> to vector<16x128xf32>
      %50 = arith.addf %44, %49 : vector<16x128xf32>
      %51 = vector.extract_strided_slice %12 {offsets = [0, 6], sizes = [16, 1], strides = [1, 1]} : vector<16x8xi32> to vector<16x1xi32>
      %52 = vector.broadcast %51 : vector<16x1xi32> to vector<16x128xi32>
      %53 = arith.cmpi eq, %52, %13 : vector<16x128xi32>
      %54 = arith.extui %53 : vector<16x128xi1> to vector<16x128xi32>
      %55 = arith.sitofp %54 : vector<16x128xi32> to vector<16x128xf32>
      %56 = arith.addf %50, %55 : vector<16x128xf32>
      %57 = vector.extract_strided_slice %12 {offsets = [0, 7], sizes = [16, 1], strides = [1, 1]} : vector<16x8xi32> to vector<16x1xi32>
      %58 = vector.broadcast %57 : vector<16x1xi32> to vector<16x128xi32>
      %59 = arith.cmpi eq, %58, %13 : vector<16x128xi32>
      %60 = arith.extui %59 : vector<16x128xi1> to vector<16x128xi32>
      %61 = arith.sitofp %60 : vector<16x128xi32> to vector<16x128xf32>
      %62 = arith.addf %56, %61 : vector<16x128xf32>
      %63 = arith.truncf %62 : vector<16x128xf32> to vector<16x128xbf16>
      %c0_12 = arith.constant 0 : index
      %c0_13 = arith.constant 0 : index
      %64 = vector.load %arg6[%c0_12, %c0_13] : memref<128x256xbf16, #tpu.memory_space<vmem>>, vector<128x256xbf16>
      %cst_14 = arith.constant dense<0.000000e+00> : vector<16x256xf32>
      %65 = tpu.matmul %63, %64, %cst_14 {dimension_numbers = #tpu.dot_dimension_numbers<[1], [0], [0], [1], [0, 0, 1, 1], [], []>} : vector<16x128xbf16>, vector<128x256xbf16>, vector<16x256xf32> -> vector<16x256xf32>
      %cst_15 = arith.constant 1.250000e-01 : f32
      %66 = vector.broadcast %cst_15 : f32 to vector<16x256xf32>
      %67 = arith.mulf %65, %66 : vector<16x256xf32>
      %c0_16 = arith.constant 0 : index
      %c0_17 = arith.constant 0 : index
      %68 = vector.load %arg7[%c0_16, %c0_17] : memref<1x256xf32, #tpu.memory_space<vmem>>, vector<1x256xf32>
      %69 = vector.broadcast %68 : vector<1x256xf32> to vector<16x256xf32>
      %70 = arith.addf %67, %69 : vector<16x256xf32>
      %c0_18 = arith.constant 0 : index
      %c0_19 = arith.constant 0 : index
      %71 = vector.load %arg15[%c0_18, %c0_19] : memref<16x256xf32, #tpu.memory_space<vmem>>, vector<16x256xf32>
      %c0_20 = arith.constant 0 : index
      %c0_21 = arith.constant 0 : index
      %72 = vector.load %arg5[%c0_20, %c0_21] : memref<1x256xf32, #tpu.memory_space<vmem>>, vector<1x256xf32>
      %73 = vector.broadcast %72 : vector<1x256xf32> to vector<16x256xf32>
      %74 = arith.addf %71, %73 : vector<16x256xf32>
      %75 = arith.mulf %74, %70 : vector<16x256xf32>
      %76 = arith.truncf %75 : vector<16x256xf32> to vector<16x256xbf16>
      %c0_22 = arith.constant 0 : index
      %c0_23 = arith.constant 0 : index
      %77 = vector.load %arg8[%c0_22, %c0_23] : memref<256x512xbf16, #tpu.memory_space<vmem>>, vector<256x512xbf16>
      %cst_24 = arith.constant dense<0.000000e+00> : vector<16x512xf32>
      %78 = tpu.matmul %76, %77, %cst_24 {dimension_numbers = #tpu.dot_dimension_numbers<[1], [0], [0], [1], [0, 0, 1, 1], [], []>} : vector<16x256xbf16>, vector<256x512xbf16>, vector<16x512xf32> -> vector<16x512xf32>
      %c0_25 = arith.constant 0 : index
      %c0_26 = arith.constant 0 : index
      %79 = vector.load %arg9[%c0_25, %c0_26] : memref<1x512xf32, #tpu.memory_space<vmem>>, vector<1x512xf32>
      %80 = vector.broadcast %79 : vector<1x512xf32> to vector<16x512xf32>
      %81 = arith.addf %78, %80 : vector<16x512xf32>
      %cst_27 = arith.constant 0.000000e+00 : f32
      %82 = vector.broadcast %cst_27 : f32 to vector<16x512xf32>
      %83 = arith.maximumf %81, %82 : vector<16x512xf32>
      %84 = arith.truncf %83 : vector<16x512xf32> to vector<16x512xbf16>
      %c0_28 = arith.constant 0 : index
      %c0_29 = arith.constant 0 : index
      %85 = vector.load %arg10[%c0_28, %c0_29] : memref<512x256xbf16, #tpu.memory_space<vmem>>, vector<512x256xbf16>
      %cst_30 = arith.constant dense<0.000000e+00> : vector<16x256xf32>
      %86 = tpu.matmul %84, %85, %cst_30 {dimension_numbers = #tpu.dot_dimension_numbers<[1], [0], [0], [1], [0, 0, 1, 1], [], []>} : vector<16x512xbf16>, vector<512x256xbf16>, vector<16x256xf32> -> vector<16x256xf32>
      %c0_31 = arith.constant 0 : index
      %c0_32 = arith.constant 0 : index
      %87 = vector.load %arg11[%c0_31, %c0_32] : memref<1x256xf32, #tpu.memory_space<vmem>>, vector<1x256xf32>
      %88 = vector.broadcast %87 : vector<1x256xf32> to vector<16x256xf32>
      %89 = arith.addf %86, %88 : vector<16x256xf32>
      %cst_33 = arith.constant 0.000000e+00 : f32
      %90 = vector.broadcast %cst_33 : f32 to vector<16x256xf32>
      %91 = arith.maximumf %89, %90 : vector<16x256xf32>
      %92 = arith.truncf %91 : vector<16x256xf32> to vector<16x256xbf16>
      %c0_34 = arith.constant 0 : index
      %c0_35 = arith.constant 0 : index
      %93 = vector.load %arg12[%c0_34, %c0_35] : memref<256x128xbf16, #tpu.memory_space<vmem>>, vector<256x128xbf16>
      %cst_36 = arith.constant dense<0.000000e+00> : vector<16x128xf32>
      %94 = tpu.matmul %92, %93, %cst_36 {dimension_numbers = #tpu.dot_dimension_numbers<[1], [0], [0], [1], [0, 0, 1, 1], [], []>} : vector<16x256xbf16>, vector<256x128xbf16>, vector<16x128xf32> -> vector<16x128xf32>
      %c0_37 = arith.constant 0 : index
      %c0_38 = arith.constant 0 : index
      %95 = vector.load %arg13[%c0_37, %c0_38] : memref<1x128xf32, #tpu.memory_space<vmem>>, vector<1x128xf32>
      %96 = vector.broadcast %95 : vector<1x128xf32> to vector<16x128xf32>
      %97 = arith.addf %94, %96 : vector<16x128xf32>
      %c0_39 = arith.constant 0 : index
      %c0_40 = arith.constant 0 : index
      %98 = vector.load %arg14[%c0_39, %c0_40] : memref<16x128xf32, #tpu.memory_space<vmem>>, vector<16x128xf32>
      tpu.vector_store %arg14[%c0_39, %c0_40], %97 {strides = array<i32>} : memref<16x128xf32, #tpu.memory_space<vmem>>, vector<16x128xf32>,
    } else {
    }
    return
  }
  func.func @transform_0(%arg0: i32, %arg1: i32) -> (i32, i32) {
    %c0_i32 = arith.constant 0 : i32
    %c0_i32_0 = arith.constant 0 : i32
    return %arg0, %c0_i32 : i32, i32
  }
  func.func @transform_1(%arg0: i32, %arg1: i32) -> (i32, i32) {
    %c0_i32 = arith.constant 0 : i32
    return %arg0, %arg1 : i32, i32
  }
  func.func @transform_2(%arg0: i32, %arg1: i32) -> (i32, i32) {
    %c0_i32 = arith.constant 0 : i32
    %c0_i32_0 = arith.constant 0 : i32
    return %arg1, %c0_i32 : i32, i32
  }
  func.func @transform_3(%arg0: i32, %arg1: i32) -> (i32, i32) {
    %c0_i32 = arith.constant 0 : i32
    %c0_i32_0 = arith.constant 0 : i32
    %c0_i32_1 = arith.constant 0 : i32
    return %c0_i32, %c0_i32_0 : i32, i32
  }
  func.func @transform_4(%arg0: i32, %arg1: i32) -> (i32, i32) {
    %c0_i32 = arith.constant 0 : i32
    %c0_i32_0 = arith.constant 0 : i32
    %c0_i32_1 = arith.constant 0 : i32
    return %c0_i32, %c0_i32_0 : i32, i32
  }
  func.func @transform_5(%arg0: i32, %arg1: i32) -> (i32, i32) {
    %c0_i32 = arith.constant 0 : i32
    %c0_i32_0 = arith.constant 0 : i32
    %c0_i32_1 = arith.constant 0 : i32
    return %c0_i32, %c0_i32_0 : i32, i32
  }
  func.func @transform_6(%arg0: i32, %arg1: i32) -> (i32, i32) {
    %c0_i32 = arith.constant 0 : i32
    %c0_i32_0 = arith.constant 0 : i32
    %c0_i32_1 = arith.constant 0 : i32
    return %c0_i32, %c0_i32_0 : i32, i32
  }
  func.func @transform_7(%arg0: i32, %arg1: i32) -> (i32, i32) {
    %c0_i32 = arith.constant 0 : i32
    %c0_i32_0 = arith.constant 0 : i32
    %c0_i32_1 = arith.constant 0 : i32
    return %c0_i32, %c0_i32_0 : i32, i32
  }
  func.func @transform_8(%arg0: i32, %arg1: i32) -> (i32, i32) {
    %c0_i32 = arith.constant 0 : i32
    %c0_i32_0 = arith.constant 0 : i32
    %c0_i32_1 = arith.constant 0 : i32
    return %c0_i32, %c0_i32_0 : i32, i32
  }
  func.func @transform_9(%arg0: i32, %arg1: i32) -> (i32, i32) {
    %c0_i32 = arith.constant 0 : i32
    %c0_i32_0 = arith.constant 0 : i32
    %c0_i32_1 = arith.constant 0 : i32
    return %c0_i32, %c0_i32_0 : i32, i32
  }
  func.func @transform_10(%arg0: i32, %arg1: i32) -> (i32, i32) {
    %c0_i32 = arith.constant 0 : i32
    %c0_i32_0 = arith.constant 0 : i32
    %c0_i32_1 = arith.constant 0 : i32
    return %c0_i32, %c0_i32_0 : i32, i32
  }
  func.func @transform_11(%arg0: i32, %arg1: i32) -> (i32, i32) {
    %c0_i32 = arith.constant 0 : i32
    %c0_i32_0 = arith.constant 0 : i32
    %c0_i32_1 = arith.constant 0 : i32
    return %c0_i32, %c0_i32_0 : i32, i32
  }
  func.func @transform_12(%arg0: i32, %arg1: i32) -> (i32, i32) {
    %c0_i32 = arith.constant 0 : i32
    %c0_i32_0 = arith.constant 0 : i32
    return %arg0, %c0_i32 : i32, i32
  }
}

</mosaic_0001>

<llo_original>
// kernel: tpu_custom_call.1
$region0: #{tpu_custom_call.1}
  #allocation0 [shape = 'u32[]', space=smem, size = 0x4, offset = 0x4, fixed_abs, tag = 'smem constant byte address 0x4 - core index']
  #allocation1 [shape = 'u32[144,128]{1,0:T(1,128)}', space=vmem, size = 0x12000, scoped, tag = 'internal scratch']
  #allocation2 [shape = 'f32[16,256]{1,0:T(8,128)}', space=vmem, size = 0x4000, scoped, tag = 'scratch operand']
  %s0 = inlined_call_operand.vmem [shape: s32[16,8], index: 0, kind: input, shape index: {}]
  %s1 = inlined_call_operand.hbm [shape: bf16[16,1024], index: 1, kind: input, shape index: {}]
  %s2 = inlined_call_operand.hbm [shape: bf16[1024,256], index: 2, kind: input, shape index: {}]
  %s3 = inlined_call_operand.vmem [shape: f32[1,256], index: 3, kind: input, shape index: {}]
  %s4 = inlined_call_operand.hbm [shape: bf16[128,256], index: 4, kind: input, shape index: {}]
  %s5 = inlined_call_operand.vmem [shape: f32[1,256], index: 5, kind: input, shape index: {}]
  %s6 = inlined_call_operand.hbm [shape: bf16[256,512], index: 6, kind: input, shape index: {}]
  %s7 = inlined_call_operand.vmem [shape: f32[1,512], index: 7, kind: input, shape index: {}]
  %s8 = inlined_call_operand.hbm [shape: bf16[512,256], index: 8, kind: input, shape index: {}]
  %s9 = inlined_call_operand.vmem [shape: f32[1,256], index: 9, kind: input, shape index: {}]
  %s10 = inlined_call_operand.hbm [shape: bf16[256,128], index: 10, kind: input, shape index: {}]
  %s11 = inlined_call_operand.vmem [shape: f32[1,128], index: 11, kind: input, shape index: {}]
  %s12 = inlined_call_operand.hbm [shape: f32[16,128], index: 12, kind: output, shape index: {}]
  %s13 = sld [smem:[#allocation0]]
  $region113: #{tpu_custom_call.1} parent=0
    _
  %s15 = ssub.s32 1, %s13
  %s16 = scalar_select 0, %s15, %s13
  $region1: #{tpu_custom_call.1} parent=0
    #allocation3 [shape = 'u8[32768]{0}', space=vmem, size = 0x8000, scoped, tag = 'input window, operand 1']
    #allocation4 [shape = 's32[2]{0}', space=sflag, size = 0x8, scoped, tag = 'scoped memory for tpu_custom_call.1']
    #allocation5 [shape = 's32[2]{0}', space=sflag, size = 0x8, scoped, tag = 'scoped memory for tpu_custom_call.1']
    #allocation6 [shape = 'u8[524288]{0}', space=vmem, size = 0x80000, scoped, tag = 'input window, operand 2']
    #allocation7 [shape = 's32[2]{0}', space=sflag, size = 0x8, scoped, tag = 'scoped memory for tpu_custom_call.1']
    #allocation8 [shape = 'u8[65536]{0}', space=vmem, size = 0x10000, scoped, tag = 'input window, operand 4, single buffered']
    #allocation9 [shape = 'u8[262144]{0}', space=vmem, size = 0x40000, scoped, tag = 'input window, operand 6, single buffered']
    #allocation10 [shape = 's32[1]{0}', space=sflag, size = 0x4, scoped, tag = 'scoped memory for tpu_custom_call.1']
    #allocation11 [shape = 'u8[262144]{0}', space=vmem, size = 0x40000, scoped, tag = 'input window, operand 8, single buffered']
    #allocation12 [shape = 'u8[65536]{0}', space=vmem, size = 0x10000, scoped, tag = 'input window, operand 10, single buffered']
    #allocation13 [shape = 's32[1]{0}', space=sflag, size = 0x4, scoped, tag = 'scoped memory for tpu_custom_call.1']
    #allocation14 [shape = 'u8[8192]{0}', space=vmem, size = 0x2000, scoped, tag = 'output window, operand 0, single buffered']
    %17 = vsyncpa [#allocation4], 0
    %s18 = scalar_lea.sflag [#allocation4], 1
    %19 = vsyncpa %s18, 0
    %20 = vsyncpa [#allocation7], 0
    %s21 = scalar_lea.sflag [#allocation7], 1
    %22 = vsyncpa %s21, 0
    %23 = vsyncpa [#allocation10], 0
    %24 = vsyncpa [#allocation13], 0
    %25 = vsyncpa [#allocation5], 0
    loop: start=0, step=1, limit=4
    $region2: #{tpu_custom_call.1} parent=1 // loop_pre_header
      _
    $region3: #{tpu_custom_call.1} parent=1 // loop_header
      %s27 = sphi 0, %s31
      %p28 = scmp.ge.s32.totalorder %s27, 4
      %s34 = sphi 0, %s46
      %s35 = sphi 0, %s42
      %s36 = sphi 0, %s34
      %s37 = sphi 0, %s35
      %s38 = sphi 0, %s36
      %s39 = sphi 0, %s37
      %s49 = sphi 0, %s51
      %s52 = sphi 0, %s49
      %s53 = sphi 0, %s52
      %s69 = sphi 0, %s53
      %s77 = sphi 0, %s79
      %s80 = sphi 0, %s77
      %s81 = sphi 0, %s80
      %s97 = sphi 0, %s81
      %s103 = sphi 0, %s105
      %s106 = sphi 0, %s103
      %s107 = sphi 0, %s106
      %s123 = sphi 0, %s107
      %s127 = sphi 0, %s127
      %s129 = sphi 0, %s127
      %s130 = sphi 0, %s129
      %s144 = sphi 0, %s130
      %s148 = sphi 0, %s148
      %s150 = sphi 0, %s148
      %s151 = sphi 0, %s150
      %s165 = sphi 0, %s151
      %s169 = sphi 0, %s169
      %s171 = sphi 0, %s169
      %s172 = sphi 0, %s171
      %s186 = sphi 0, %s172
      %s190 = sphi 0, %s190
      %s192 = sphi 0, %s190
      %s193 = sphi 0, %s192
      %s207 = sphi 0, %s193
      %s211 = sphi 0, %s211
      %s213 = sphi 0, %s211
      %s214 = sphi 0, %s213
      %s228 = sphi 0, %s214
      %s232 = sphi 0, %s232
      %s234 = sphi 0, %s232
      %s235 = sphi 0, %s234
      %s249 = sphi 0, %s235
      %s253 = sphi 0, %s253
      %s255 = sphi 0, %s253
      %s256 = sphi 0, %s255
      %s270 = sphi 0, %s256
      %s274 = sphi 0, %s274
      %s276 = sphi 0, %s274
      %s277 = sphi 0, %s276
      %s291 = sphi 0, %s277
      %s295 = sphi 0, %s295
      %s297 = sphi 0, %s295
      %s298 = sphi 0, %s297
      %s312 = sphi 0, %s298
      %s318 = sphi 0, %s320
      %s321 = sphi 0, %s318
      %s322 = sphi 0, %s321
      %s338 = sphi 0, %s322
    $region4: #{tpu_custom_call.1} parent=1 // loop_header_branch
      %30 = sbr.rel (%p28) target = $region8
    $region5: #{tpu_custom_call.1} parent=1 // loop_body
      %s32 = ssub.s32 %s27, 1
      %s33 = ssub.s32 %s27, 2
      %s40 = sadd.s32 1, %s35
      %p41 = scmp.ge.s32.totalorder %s40, 2
      %s42 = scalar_select %p41, 0, %s40
      %s43 = sadd.s32 1, %s34
      %s44 = scalar_select %p41, %s43, %s34
      %p45 = scmp.ge.s32.totalorder %s44, 1
      %s46 = scalar_select %p45, 0, %s44
      %s47 = ssub.s32 %s34, %s46
      %p48 = scmp.eq.s32.totalorder %s47, 0
      %s50 = sadd.s32 %s49, 1
      %s51 = scalar_select %p48, %s49, %s50
      %p54 = pneg %p48
      %p55 = scmp.eq.s32.totalorder %s27, 1
      %p56 = por %p54, %p55
      %p57 = scmp.ne.s32.totalorder %s49, %s52
      %p58 = scmp.eq.s32.totalorder %s27, 0
      %p59 = por %p57, %p58
      %p60 = scmp.ne.s32.totalorder %s49, %s52
      %p61 = scmp.eq.s32.totalorder %s32, 1
      %p62 = por %p60, %p61
      %p63 = scmp.ne.s32.totalorder %s52, %s53
      %p64 = scmp.eq.s32.totalorder %s32, 0
      %p65 = por %p63, %p64
      %p66 = scmp.ne.s32.totalorder %s52, %s53
      %p67 = scmp.eq.s32.totalorder %s33, 1
      %p68 = por %p66, %p67
      %p70 = scmp.ne.s32.totalorder %s53, %s69
      %p71 = scmp.eq.s32.totalorder %s33, 0
      %p72 = por %p70, %p71
      %s73 = ssub.s32 %s34, %s46
      %s74 = ssub.s32 %s35, %s42
      %s75 = sor.u32 %s73, %s74
      %p76 = scmp.eq.s32.totalorder %s75, 0
      %s78 = sadd.s32 %s77, 1
      %s79 = scalar_select %p76, %s77, %s78
      %p82 = pneg %p76
      %p83 = scmp.eq.s32.totalorder %s27, 1
      %p84 = por %p82, %p83
      %p85 = scmp.ne.s32.totalorder %s77, %s80
      %p86 = scmp.eq.s32.totalorder %s27, 0
      %p87 = por %p85, %p86
      %p88 = scmp.ne.s32.totalorder %s77, %s80
      %p89 = scmp.eq.s32.totalorder %s32, 1
      %p90 = por %p88, %p89
      %p91 = scmp.ne.s32.totalorder %s80, %s81
      %p92 = scmp.eq.s32.totalorder %s32, 0
      %p93 = por %p91, %p92
      %p94 = scmp.ne.s32.totalorder %s80, %s81
      %p95 = scmp.eq.s32.totalorder %s33, 1
      %p96 = por %p94, %p95
      %p98 = scmp.ne.s32.totalorder %s81, %s97
      %p99 = scmp.eq.s32.totalorder %s33, 0
      %p100 = por %p98, %p99
      %s101 = ssub.s32 %s35, %s42
      %p102 = scmp.eq.s32.totalorder %s101, 0
      %s104 = sadd.s32 %s103, 1
      %s105 = scalar_select %p102, %s103, %s104
      %p108 = pneg %p102
      %p109 = scmp.eq.s32.totalorder %s27, 1
      %p110 = por %p108, %p109
      %p111 = scmp.ne.s32.totalorder %s103, %s106
      %p112 = scmp.eq.s32.totalorder %s27, 0
      %p113 = por %p111, %p112
      %p114 = scmp.ne.s32.totalorder %s103, %s106
      %p115 = scmp.eq.s32.totalorder %s32, 1
      %p116 = por %p114, %p115
      %p117 = scmp.ne.s32.totalorder %s106, %s107
      %p118 = scmp.eq.s32.totalorder %s32, 0
      %p119 = por %p117, %p118
      %p120 = scmp.ne.s32.totalorder %s106, %s107
      %p121 = scmp.eq.s32.totalorder %s33, 1
      %p122 = por %p120, %p121
      %p124 = scmp.ne.s32.totalorder %s107, %s123
      %p125 = scmp.eq.s32.totalorder %s33, 0
      %p126 = por %p124, %p125
      %s128 = sadd.s32 %s127, 1
      %p131 = scmp.eq.s32.totalorder %s27, 1
      %p132 = scmp.ne.s32.totalorder %s127, %s129
      %p133 = scmp.eq.s32.totalorder %s27, 0
      %p134 = por %p132, %p133
      %p135 = scmp.ne.s32.totalorder %s127, %s129
      %p136 = scmp.eq.s32.totalorder %s32, 1
      %p137 = por %p135, %p136
      %p138 = scmp.ne.s32.totalorder %s129, %s130
      %p139 = scmp.eq.s32.totalorder %s32, 0
      %p140 = por %p138, %p139
      %p141 = scmp.ne.s32.totalorder %s129, %s130
      %p142 = scmp.eq.s32.totalorder %s33, 1
      %p143 = por %p141, %p142
      %p145 = scmp.ne.s32.totalorder %s130, %s144
      %p146 = scmp.eq.s32.totalorder %s33, 0
      %p147 = por %p145, %p146
      %s149 = sadd.s32 %s148, 1
      %p152 = scmp.eq.s32.totalorder %s27, 1
      %p153 = scmp.ne.s32.totalorder %s148, %s150
      %p154 = scmp.eq.s32.totalorder %s27, 0
      %p155 = por %p153, %p154
      %p156 = scmp.ne.s32.totalorder %s148, %s150
      %p157 = scmp.eq.s32.totalorder %s32, 1
      %p158 = por %p156, %p157
      %p159 = scmp.ne.s32.totalorder %s150, %s151
      %p160 = scmp.eq.s32.totalorder %s32, 0
      %p161 = por %p159, %p160
      %p162 = scmp.ne.s32.totalorder %s150, %s151
      %p163 = scmp.eq.s32.totalorder %s33, 1
      %p164 = por %p162, %p163
      %p166 = scmp.ne.s32.totalorder %s151, %s165
      %p167 = scmp.eq.s32.totalorder %s33, 0
      %p168 = por %p166, %p167
      %s170 = sadd.s32 %s169, 1
      %p173 = scmp.eq.s32.totalorder %s27, 1
      %p174 = scmp.ne.s32.totalorder %s169, %s171
      %p175 = scmp.eq.s32.totalorder %s27, 0
      %p176 = por %p174, %p175
      %p177 = scmp.ne.s32.totalorder %s169, %s171
      %p178 = scmp.eq.s32.totalorder %s32, 1
      %p179 = por %p177, %p178
      %p180 = scmp.ne.s32.totalorder %s171, %s172
      %p181 = scmp.eq.s32.totalorder %s32, 0
      %p182 = por %p180, %p181
      %p183 = scmp.ne.s32.totalorder %s171, %s172
      %p184 = scmp.eq.s32.totalorder %s33, 1
      %p185 = por %p183, %p184
      %p187 = scmp.ne.s32.totalorder %s172, %s186
      %p188 = scmp.eq.s32.totalorder %s33, 0
      %p189 = por %p187, %p188
      %s191 = sadd.s32 %s190, 1
      %p194 = scmp.eq.s32.totalorder %s27, 1
      %p195 = scmp.ne.s32.totalorder %s190, %s192
      %p196 = scmp.eq.s32.totalorder %s27, 0
      %p197 = por %p195, %p196
      %p198 = scmp.ne.s32.totalorder %s190, %s192
      %p199 = scmp.eq.s32.totalorder %s32, 1
      %p200 = por %p198, %p199
      %p201 = scmp.ne.s32.totalorder %s192, %s193
      %p202 = scmp.eq.s32.totalorder %s32, 0
      %p203 = por %p201, %p202
      %p204 = scmp.ne.s32.totalorder %s192, %s193
      %p205 = scmp.eq.s32.totalorder %s33, 1
      %p206 = por %p204, %p205
      %p208 = scmp.ne.s32.totalorder %s193, %s207
      %p209 = scmp.eq.s32.totalorder %s33, 0
      %p210 = por %p208, %p209
      %s212 = sadd.s32 %s211, 1
      %p215 = scmp.eq.s32.totalorder %s27, 1
      %p216 = scmp.ne.s32.totalorder %s211, %s213
      %p217 = scmp.eq.s32.totalorder %s27, 0
      %p218 = por %p216, %p217
      %p219 = scmp.ne.s32.totalorder %s211, %s213
      %p220 = scmp.eq.s32.totalorder %s32, 1
      %p221 = por %p219, %p220
      %p222 = scmp.ne.s32.totalorder %s213, %s214
      %p223 = scmp.eq.s32.totalorder %s32, 0
      %p224 = por %p222, %p223
      %p225 = scmp.ne.s32.totalorder %s213, %s214
      %p226 = scmp.eq.s32.totalorder %s33, 1
      %p227 = por %p225, %p226
      %p229 = scmp.ne.s32.totalorder %s214, %s228
      %p230 = scmp.eq.s32.totalorder %s33, 0
      %p231 = por %p229, %p230
      %s233 = sadd.s32 %s232, 1
      %p236 = scmp.eq.s32.totalorder %s27, 1
      %p237 = scmp.ne.s32.totalorder %s232, %s234
      %p238 = scmp.eq.s32.totalorder %s27, 0
      %p239 = por %p237, %p238
      %p240 = scmp.ne.s32.totalorder %s232, %s234
      %p241 = scmp.eq.s32.totalorder %s32, 1
      %p242 = por %p240, %p241
      %p243 = scmp.ne.s32.totalorder %s234, %s235
      %p244 = scmp.eq.s32.totalorder %s32, 0
      %p245 = por %p243, %p244
      %p246 = scmp.ne.s32.totalorder %s234, %s235
      %p247 = scmp.eq.s32.totalorder %s33, 1
      %p248 = por %p246, %p247
      %p250 = scmp.ne.s32.totalorder %s235, %s249
      %p251 = scmp.eq.s32.totalorder %s33, 0
      %p252 = por %p250, %p251
      %s254 = sadd.s32 %s253, 1
      %p257 = scmp.eq.s32.totalorder %s27, 1
      %p258 = scmp.ne.s32.totalorder %s253, %s255
      %p259 = scmp.eq.s32.totalorder %s27, 0
      %p260 = por %p258, %p259
      %p261 = scmp.ne.s32.totalorder %s253, %s255
      %p262 = scmp.eq.s32.totalorder %s32, 1
      %p263 = por %p261, %p262
      %p264 = scmp.ne.s32.totalorder %s255, %s256
      %p265 = scmp.eq.s32.totalorder %s32, 0
      %p266 = por %p264, %p265
      %p267 = scmp.ne.s32.totalorder %s255, %s256
      %p268 = scmp.eq.s32.totalorder %s33, 1
      %p269 = por %p267, %p268
      %p271 = scmp.ne.s32.totalorder %s256, %s270
      %p272 = scmp.eq.s32.totalorder %s33, 0
      %p273 = por %p271, %p272
      %s275 = sadd.s32 %s274, 1
      %p278 = scmp.eq.s32.totalorder %s27, 1
      %p279 = scmp.ne.s32.totalorder %s274, %s276
      %p280 = scmp.eq.s32.totalorder %s27, 0
      %p281 = por %p279, %p280
      %p282 = scmp.ne.s32.totalorder %s274, %s276
      %p283 = scmp.eq.s32.totalorder %s32, 1
      %p284 = por %p282, %p283
      %p285 = scmp.ne.s32.totalorder %s276, %s277
      %p286 = scmp.eq.s32.totalorder %s32, 0
      %p287 = por %p285, %p286
      %p288 = scmp.ne.s32.totalorder %s276, %s277
      %p289 = scmp.eq.s32.totalorder %s33, 1
      %p290 = por %p288, %p289
      %p292 = scmp.ne.s32.totalorder %s277, %s291
      %p293 = scmp.eq.s32.totalorder %s33, 0
      %p294 = por %p292, %p293
      %s296 = sadd.s32 %s295, 1
      %p299 = scmp.eq.s32.totalorder %s27, 1
      %p300 = scmp.ne.s32.totalorder %s295, %s297
      %p301 = scmp.eq.s32.totalorder %s27, 0
      %p302 = por %p300, %p301
      %p303 = scmp.ne.s32.totalorder %s295, %s297
      %p304 = scmp.eq.s32.totalorder %s32, 1
      %p305 = por %p303, %p304
      %p306 = scmp.ne.s32.totalorder %s297, %s298
      %p307 = scmp.eq.s32.totalorder %s32, 0
      %p308 = por %p306, %p307
      %p309 = scmp.ne.s32.totalorder %s297, %s298
      %p310 = scmp.eq.s32.totalorder %s33, 1
      %p311 = por %p309, %p310
      %p313 = scmp.ne.s32.totalorder %s298, %s312
      %p314 = scmp.eq.s32.totalorder %s33, 0
      %p315 = por %p313, %p314
      %s316 = ssub.s32 %s34, %s46
      %p317 = scmp.eq.s32.totalorder %s316, 0
      %s319 = sadd.s32 %s318, 1
      %s320 = scalar_select %p317, %s318, %s319
      %p323 = pneg %p317
      %p324 = scmp.eq.s32.totalorder %s27, 1
      %p325 = por %p323, %p324
      %p326 = scmp.ne.s32.totalorder %s318, %s321
      %p327 = scmp.eq.s32.totalorder %s27, 0
      %p328 = por %p326, %p327
      %p329 = scmp.ne.s32.totalorder %s318, %s321
      %p330 = scmp.eq.s32.totalorder %s32, 1
      %p331 = por %p329, %p330
      %p332 = scmp.ne.s32.totalorder %s321, %s322
      %p333 = scmp.eq.s32.totalorder %s32, 0
      %p334 = por %p332, %p333
      %p335 = scmp.ne.s32.totalorder %s321, %s322
      %p336 = scmp.eq.s32.totalorder %s33, 1
      %p337 = por %p335, %p336
      %p339 = scmp.ne.s32.totalorder %s322, %s338
      %p340 = scmp.eq.s32.totalorder %s33, 0
      %p341 = por %p339, %p340
      %p342 = scmp.le.s32.totalorder 1, %s27
      %p343 = scmp.lt.s32.totalorder %s27, 3
      %p344 = pnand %p342, %p343
      %p345 = pneg %p344
      // Predicated region
      $region9: #{tpu_custom_call.1} parent=5 // pred_check
        _
      $region10: #{tpu_custom_call.1} parent=5 // pred_check_branch
        %347 = sbr.rel (%p344) target = $region12
      $region11: #{tpu_custom_call.1} parent=5 // pred_region
        %s348 = ssub.s32 %s27, 1
        // Predicated region
        $region13: #{tpu_custom_call.1} parent=11 // pred_check
          %p349 = pneg %p65
        $region14: #{tpu_custom_call.1} parent=11 // pred_check_branch
          %351 = sbr.rel (%p349) target = $region16
        $region15: #{tpu_custom_call.1} parent=11 // pred_region
          %s352 = smul.u32 2, %s36
          %p353 = scmp.lt.s32.totalorder %s352, 1
          %s354 = scalar_select %p353, %s352, 1
          %s355 = smul.addr %s354, 8
          %s356 = scalar_lea.vmem %s0, %s355
          %s357 = smul.u32 2, %s36
        $region16: #{tpu_custom_call.1} parent=11 // pred_fallthru
          _
        // Predicated region
        $region17: #{tpu_custom_call.1} parent=11 // pred_check
          %p358 = pneg %p140
        $region18: #{tpu_custom_call.1} parent=11 // pred_check_branch
          %360 = sbr.rel (%p358) target = $region20
        $region19: #{tpu_custom_call.1} parent=11 // pred_region
          _
        $region20: #{tpu_custom_call.1} parent=11 // pred_fallthru
          _
        // Predicated region
        $region21: #{tpu_custom_call.1} parent=11 // pred_check
          %p361 = pneg %p161
        $region22: #{tpu_custom_call.1} parent=11 // pred_check_branch
          %363 = sbr.rel (%p361) target = $region24
        $region23: #{tpu_custom_call.1} parent=11 // pred_region
          %s365 = ssub.s32 2048, 2048
          %366 = vsyncadd [#allocation7], %s365
          %s367 = sshll.u32 [#allocation8], 4
          %s368 = int_to_ptr.vmem [resolvable:$true] %s367
          %373 = dma.hbm_to_vmem [thread:$0]  %s4, 2048, %s368, [#allocation7], 128, 128, 8
        $region24: #{tpu_custom_call.1} parent=11 // pred_fallthru
          _
        // Predicated region
        $region25: #{tpu_custom_call.1} parent=11 // pred_check
          %p374 = pneg %p182
        $region26: #{tpu_custom_call.1} parent=11 // pred_check_branch
          %376 = sbr.rel (%p374) target = $region28
        $region27: #{tpu_custom_call.1} parent=11 // pred_region
          _
        $region28: #{tpu_custom_call.1} parent=11 // pred_fallthru
          _
        // Predicated region
        $region29: #{tpu_custom_call.1} parent=11 // pred_check
          %p377 = pneg %p203
        $region30: #{tpu_custom_call.1} parent=11 // pred_check_branch
          %379 = sbr.rel (%p377) target = $region32
        $region31: #{tpu_custom_call.1} parent=11 // pred_region
          %s381 = ssub.s32 8192, 8192
          %382 = vsyncadd [#allocation10], %s381
          %s383 = sshll.u32 [#allocation9], 4
          %s384 = int_to_ptr.vmem [resolvable:$true] %s383
          %389 = dma.hbm_to_vmem [thread:$0]  %s6, 8192, %s384, [#allocation10], 256, 256, 16
        $region32: #{tpu_custom_call.1} parent=11 // pred_fallthru
          _
        // Predicated region
        $region33: #{tpu_custom_call.1} parent=11 // pred_check
          %p390 = pneg %p224
        $region34: #{tpu_custom_call.1} parent=11 // pred_check_branch
          %392 = sbr.rel (%p390) target = $region36
        $region35: #{tpu_custom_call.1} parent=11 // pred_region
          _
        $region36: #{tpu_custom_call.1} parent=11 // pred_fallthru
          _
        // Predicated region
        $region37: #{tpu_custom_call.1} parent=11 // pred_check
          %p393 = pneg %p245
        $region38: #{tpu_custom_call.1} parent=11 // pred_check_branch
          %395 = sbr.rel (%p393) target = $region40
        $region39: #{tpu_custom_call.1} parent=11 // pred_region
          %s397 = ssub.s32 8192, 8192
          %398 = vsyncadd [#allocation10], %s397
          %s399 = sshll.u32 [#allocation11], 4
          %s400 = int_to_ptr.vmem [resolvable:$true] %s399
          %405 = dma.hbm_to_vmem [thread:$0]  %s8, 8192, %s400, [#allocation10], 128, 128, 8
        $region40: #{tpu_custom_call.1} parent=11 // pred_fallthru
          _
        // Predicated region
        $region41: #{tpu_custom_call.1} parent=11 // pred_check
          %p406 = pneg %p266
        $region42: #{tpu_custom_call.1} parent=11 // pred_check_branch
          %408 = sbr.rel (%p406) target = $region44
        $region43: #{tpu_custom_call.1} parent=11 // pred_region
          _
        $region44: #{tpu_custom_call.1} parent=11 // pred_fallthru
          _
        // Predicated region
        $region45: #{tpu_custom_call.1} parent=11 // pred_check
          %p409 = pneg %p287
        $region46: #{tpu_custom_call.1} parent=11 // pred_check_branch
          %411 = sbr.rel (%p409) target = $region48
        $region47: #{tpu_custom_call.1} parent=11 // pred_region
          %s413 = ssub.s32 2048, 2048
          %414 = vsyncadd [#allocation13], %s413
          %s415 = sshll.u32 [#allocation12], 4
          %s416 = int_to_ptr.vmem [resolvable:$true] %s415
          %421 = dma.hbm_to_vmem [thread:$0]  %s10, 2048, %s416, [#allocation13], 64, 64, 4
        $region48: #{tpu_custom_call.1} parent=11 // pred_fallthru
          _
        // Predicated region
        $region49: #{tpu_custom_call.1} parent=11 // pred_check
          %p422 = pneg %p308
        $region50: #{tpu_custom_call.1} parent=11 // pred_check_branch
          %424 = sbr.rel (%p422) target = $region52
        $region51: #{tpu_custom_call.1} parent=11 // pred_region
          _
        $region52: #{tpu_custom_call.1} parent=11 // pred_fallthru
          _
      $region12: #{tpu_custom_call.1} parent=5 // pred_fallthru
        _
      %p425 = scmp.lt.s32.totalorder %s27, 2
      // Predicated region
      $region53: #{tpu_custom_call.1} parent=5 // pred_check
        %p426 = pneg %p425
      $region54: #{tpu_custom_call.1} parent=5 // pred_check_branch
        %428 = sbr.rel (%p426) target = $region56
      $region55: #{tpu_custom_call.1} parent=5 // pred_region
        // Predicated region
        $region57: #{tpu_custom_call.1} parent=55 // pred_check
          %p429 = pneg %p87
        $region58: #{tpu_custom_call.1} parent=55 // pred_check_branch
          %431 = sbr.rel (%p429) target = $region60
        $region59: #{tpu_custom_call.1} parent=55 // pred_region
          %s432 = sand.u32 %s77, 1
          %s433 = scalar_lea.sflag [#allocation4], %s432
          %s434 = sand.u32 %s77, 1
          %s435 = smul.addr %s434, 32
          %s436 = scalar_lea.vmem [#allocation3], %s435
          %s437 = smul.u32 2, %s34
          %s438 = smul.u32 4, %s35
          %s440 = ssub.s32 512, 512
          %441 = vsyncadd %s433, %s440
          %s442 = smul.addr %s437, 8
          %s443 = sadd.s32 %s438, %s442
          %s444 = smul.addr %s443, 64
          %s445 = scalar_lea.hbm %s1, %s444
          %s446 = sshll.u32 %s436, 4
          %s447 = int_to_ptr.vmem [resolvable:$true] %s446
          %452 = dma.hbm_to_vmem [thread:$0]  %s445, 512, %s447, %s433, 512, 256, 16
        $region60: #{tpu_custom_call.1} parent=55 // pred_fallthru
          _
        // Predicated region
        $region61: #{tpu_custom_call.1} parent=55 // pred_check
          %p453 = pneg %p113
        $region62: #{tpu_custom_call.1} parent=55 // pred_check_branch
          %455 = sbr.rel (%p453) target = $region64
        $region63: #{tpu_custom_call.1} parent=55 // pred_region
          %s456 = sand.u32 %s27, 1
          %s457 = scalar_lea.sflag [#allocation7], %s456
          %s458 = sand.u32 %s103, 1
          %s459 = smul.addr %s458, 512
          %s460 = scalar_lea.vmem [#allocation6], %s459
          %s461 = smul.u32 64, %s35
          %s463 = ssub.s32 8192, 8192
          %464 = vsyncadd %s457, %s463
          %s465 = smul.addr %s461, 2
          %s466 = smul.addr %s465, 64
          %s467 = scalar_lea.hbm %s2, %s466
          %s468 = sshll.u32 %s460, 4
          %s469 = int_to_ptr.vmem [resolvable:$true] %s468
          %474 = dma.hbm_to_vmem [thread:$0]  %s467, 8192, %s469, %s457, 128, 128, 8
        $region64: #{tpu_custom_call.1} parent=55 // pred_fallthru
          _
      $region56: #{tpu_custom_call.1} parent=5 // pred_fallthru
        _
      %p475 = scmp.le.s32.totalorder 1, %s27
      %p476 = scmp.lt.s32.totalorder %s27, 3
      %p477 = pnand %p475, %p476
      %p478 = pneg %p477
      // Predicated region
      $region65: #{tpu_custom_call.1} parent=5 // pred_check
        _
      $region66: #{tpu_custom_call.1} parent=5 // pred_check_branch
        %480 = sbr.rel (%p477) target = $region68
      $region67: #{tpu_custom_call.1} parent=5 // pred_region
        %s481 = ssub.s32 %s27, 1
        %s482 = sand.u32 %s80, 1
        %s483 = scalar_lea.sflag [#allocation4], %s482
        %s484 = sand.u32 %s80, 1
        %s485 = smul.addr %s484, 32
        %s486 = scalar_lea.vmem [#allocation3], %s485
        // Predicated region
        $region69: #{tpu_custom_call.1} parent=67 // pred_check
          %p487 = pneg %p93
        $region70: #{tpu_custom_call.1} parent=67 // pred_check_branch
          %489 = sbr.rel (%p487) target = $region72
        $region71: #{tpu_custom_call.1} parent=67 // pred_region
          %490 = dma.done %s483, 512
        $region72: #{tpu_custom_call.1} parent=67 // pred_fallthru
          _
        %s491 = sand.u32 %s32, 1
        %s492 = scalar_lea.sflag [#allocation7], %s491
        %s493 = sand.u32 %s106, 1
        %s494 = smul.addr %s493, 512
        %s495 = scalar_lea.vmem [#allocation6], %s494
        // Predicated region
        $region73: #{tpu_custom_call.1} parent=67 // pred_check
          %p496 = pneg %p119
        $region74: #{tpu_custom_call.1} parent=67 // pred_check_branch
          %498 = sbr.rel (%p496) target = $region76
        $region75: #{tpu_custom_call.1} parent=67 // pred_region
          %499 = dma.done %s492, 8192
        $region76: #{tpu_custom_call.1} parent=67 // pred_fallthru
          _
        // Predicated region
        $region77: #{tpu_custom_call.1} parent=67 // pred_check
          %p500 = pneg %p161
        $region78: #{tpu_custom_call.1} parent=67 // pred_check_branch
          %502 = sbr.rel (%p500) target = $region80
        $region79: #{tpu_custom_call.1} parent=67 // pred_region
          %503 = dma.done [#allocation7], 2048
        $region80: #{tpu_custom_call.1} parent=67 // pred_fallthru
          _
        // Predicated region
        $region81: #{tpu_custom_call.1} parent=67 // pred_check
          %p504 = pneg %p203
        $region82: #{tpu_custom_call.1} parent=67 // pred_check_branch
          %506 = sbr.rel (%p504) target = $region84
        $region83: #{tpu_custom_call.1} parent=67 // pred_region
          %507 = dma.done [#allocation10], 8192
        $region84: #{tpu_custom_call.1} parent=67 // pred_fallthru
          _
        // Predicated region
        $region85: #{tpu_custom_call.1} parent=67 // pred_check
          %p508 = pneg %p245
        $region86: #{tpu_custom_call.1} parent=67 // pred_check_branch
          %510 = sbr.rel (%p508) target = $region88
        $region87: #{tpu_custom_call.1} parent=67 // pred_region
          %511 = dma.done [#allocation10], 8192
        $region88: #{tpu_custom_call.1} parent=67 // pred_fallthru
          _
        // Predicated region
        $region89: #{tpu_custom_call.1} parent=67 // pred_check
          %p512 = pneg %p287
        $region90: #{tpu_custom_call.1} parent=67 // pred_check_branch
          %514 = sbr.rel (%p512) target = $region92
        $region91: #{tpu_custom_call.1} parent=67 // pred_region
          %515 = dma.done [#allocation13], 2048
        $region92: #{tpu_custom_call.1} parent=67 // pred_fallthru
          _
        %s516 = smul.u32 2, %s36
        %p517 = scmp.lt.s32.totalorder %s516, 1
        %s518 = scalar_select %p517, %s516, 1
        %s519 = smul.addr %s518, 8
        %s520 = scalar_lea.vmem %s0, %s519
        %p521 = pneg %p65
        %p522 = pneg %p62
        %s523 = sand.u32 %s80, 1
        %s524 = scalar_lea.sflag [#allocation4], %s523
        %s525 = sand.u32 %s80, 1
        %s526 = smul.addr %s525, 32
        %s527 = scalar_lea.vmem [#allocation3], %s526
        %p528 = pneg %p93
        %p529 = pneg %p90
        %s530 = sand.u32 %s32, 1
        %s531 = scalar_lea.sflag [#allocation7], %s530
        %s532 = sand.u32 %s106, 1
        %s533 = smul.addr %s532, 512
        %s534 = scalar_lea.vmem [#allocation6], %s533
        %p535 = pneg %p119
        %p536 = pneg %p116
        %p537 = pneg %p140
        %p538 = pneg %p137
        %p539 = pneg %p161
        %p540 = pneg %p158
        %p541 = pneg %p182
        %p542 = pneg %p179
        %p543 = pneg %p203
        %p544 = pneg %p200
        %p545 = pneg %p224
        %p546 = pneg %p221
        %p547 = pneg %p245
        %p548 = pneg %p242
        %p549 = pneg %p266
        %p550 = pneg %p263
        %p551 = pneg %p287
        %p552 = pneg %p284
        %p553 = pneg %p308
        %p554 = pneg %p305
        %p555 = pneg %p334
        %p556 = pneg %p331
        %s557 = smul.u32 2, %s36
        %p558 = scmp.lt.s32.totalorder %s557, 1
        %s559 = scalar_select %p558, %s557, 1
        %s560 = smul.addr %s559, 8
        %s561 = scalar_lea.vmem %s0, %s560
        %s562 = smul.u32 2, %s36
        %s563 = smul.u32 2, %s36
        %s564 = smul.u32 4, %s37
        %s565 = smul.u32 64, %s37
        %s566 = smul.u32 2, %s36
        %p568 = scmp.eq.s32.totalorder %s37, 0
        // Predicated region
        $region93: #{tpu_custom_call.1} parent=67 // pred_check
          %p569 = pneg %p568
        $region94: #{tpu_custom_call.1} parent=67 // pred_check_branch
          %571 = sbr.rel (%p569) target = $region96
        $region95: #{tpu_custom_call.1} parent=67 // pred_region
          %572 = vst [vmem:[#allocation2] sm:$0xff] 0.0
          %573 = vst [vmem:[#allocation2 + $0x8] sm:$0xff] 0.0
          %574 = vst [vmem:[#allocation2 + $0x10] sm:$0xff] 0.0
          %575 = vst [vmem:[#allocation2 + $0x18] sm:$0xff] 0.0
        $region96: #{tpu_custom_call.1} parent=67 // pred_fallthru
          _
        %v576 = vld [vmem:[#allocation2] sm:$0xff]
        %v577 = vld [vmem:[#allocation2 + $0x8] sm:$0xff]
        %v578 = vld [vmem:[#allocation2 + $0x10] sm:$0xff]
        %v579 = vld [vmem:[#allocation2 + $0x18] sm:$0xff]
        %v580 = vld [vmem:[%s486] sm:$0xff]
        %v581 = vld [vmem:[%s486 + $0x8] sm:$0xff]
        %v582 = vld [vmem:[%s486 + $0x10] sm:$0xff]
        %v583 = vld [vmem:[%s486 + $0x18] sm:$0xff]
        %v584 = vld [vmem:[%s495] sm:$0xff]
        %v585 = vld [vmem:[%s495 + $0x8] sm:$0xff]
        %v586 = vld [vmem:[%s495 + $0x10] sm:$0xff]
        %v587 = vld [vmem:[%s495 + $0x18] sm:$0xff]
        %v588 = vld [vmem:[%s495 + $0x20] sm:$0xff]
        %v589 = vld [vmem:[%s495 + $0x28] sm:$0xff]
        %v590 = vld [vmem:[%s495 + $0x30] sm:$0xff]
        %v591 = vld [vmem:[%s495 + $0x38] sm:$0xff]
        %v592 = vld [vmem:[%s495 + $0x40] sm:$0xff]
        %v593 = vld [vmem:[%s495 + $0x48] sm:$0xff]
        %v594 = vld [vmem:[%s495 + $0x50] sm:$0xff]
        %v595 = vld [vmem:[%s495 + $0x58] sm:$0xff]
        %v596 = vld [vmem:[%s495 + $0x60] sm:$0xff]
        %v597 = vld [vmem:[%s495 + $0x68] sm:$0xff]
        %v598 = vld [vmem:[%s495 + $0x70] sm:$0xff]
        %v599 = vld [vmem:[%s495 + $0x78] sm:$0xff]
        %v600 = vld [vmem:[%s495 + $0x80] sm:$0xff]
        %v601 = vld [vmem:[%s495 + $0x88] sm:$0xff]
        %v602 = vld [vmem:[%s495 + $0x90] sm:$0xff]
        %v603 = vld [vmem:[%s495 + $0x98] sm:$0xff]
        %v604 = vld [vmem:[%s495 + $0xa0] sm:$0xff]
        %v605 = vld [vmem:[%s495 + $0xa8] sm:$0xff]
        %v606 = vld [vmem:[%s495 + $0xb0] sm:$0xff]
        %v607 = vld [vmem:[%s495 + $0xb8] sm:$0xff]
        %v608 = vld [vmem:[%s495 + $0xc0] sm:$0xff]
        %v609 = vld [vmem:[%s495 + $0xc8] sm:$0xff]
        %v610 = vld [vmem:[%s495 + $0xd0] sm:$0xff]
        %v611 = vld [vmem:[%s495 + $0xd8] sm:$0xff]
        %v612 = vld [vmem:[%s495 + $0xe0] sm:$0xff]
        %v613 = vld [vmem:[%s495 + $0xe8] sm:$0xff]
        %v614 = vld [vmem:[%s495 + $0xf0] sm:$0xff]
        %v615 = vld [vmem:[%s495 + $0xf8] sm:$0xff]
        %v616 = vld [vmem:[%s495 + $0x100] sm:$0xff]
        %v617 = vld [vmem:[%s495 + $0x108] sm:$0xff]
        %v618 = vld [vmem:[%s495 + $0x110] sm:$0xff]
        %v619 = vld [vmem:[%s495 + $0x118] sm:$0xff]
        %v620 = vld [vmem:[%s495 + $0x120] sm:$0xff]
        %v621 = vld [vmem:[%s495 + $0x128] sm:$0xff]
        %v622 = vld [vmem:[%s495 + $0x130] sm:$0xff]
        %v623 = vld [vmem:[%s495 + $0x138] sm:$0xff]
        %v624 = vld [vmem:[%s495 + $0x140] sm:$0xff]
        %v625 = vld [vmem:[%s495 + $0x148] sm:$0xff]
        %v626 = vld [vmem:[%s495 + $0x150] sm:$0xff]
        %v627 = vld [vmem:[%s495 + $0x158] sm:$0xff]
        %v628 = vld [vmem:[%s495 + $0x160] sm:$0xff]
        %v629 = vld [vmem:[%s495 + $0x168] sm:$0xff]
        %v630 = vld [vmem:[%s495 + $0x170] sm:$0xff]
        %v631 = vld [vmem:[%s495 + $0x178] sm:$0xff]
        %v632 = vld [vmem:[%s495 + $0x180] sm:$0xff]
        %v633 = vld [vmem:[%s495 + $0x188] sm:$0xff]
        %v634 = vld [vmem:[%s495 + $0x190] sm:$0xff]
        %v635 = vld [vmem:[%s495 + $0x198] sm:$0xff]
        %v636 = vld [vmem:[%s495 + $0x1a0] sm:$0xff]
        %v637 = vld [vmem:[%s495 + $0x1a8] sm:$0xff]
        %v638 = vld [vmem:[%s495 + $0x1b0] sm:$0xff]
        %v639 = vld [vmem:[%s495 + $0x1b8] sm:$0xff]
        %v640 = vld [vmem:[%s495 + $0x1c0] sm:$0xff]
        %v641 = vld [vmem:[%s495 + $0x1c8] sm:$0xff]
        %v642 = vld [vmem:[%s495 + $0x1d0] sm:$0xff]
        %v643 = vld [vmem:[%s495 + $0x1d8] sm:$0xff]
        %v644 = vld [vmem:[%s495 + $0x1e0] sm:$0xff]
        %v645 = vld [vmem:[%s495 + $0x1e8] sm:$0xff]
        %v646 = vld [vmem:[%s495 + $0x1f0] sm:$0xff]
        %v647 = vld [vmem:[%s495 + $0x1f8] sm:$0xff]
        %v652 = vunpack.c.l.b16 %v580
        %v653 = vunpack.c.h.b16 %v580
        %v654 = vunpack.c.l.b16 %v581
        %v655 = vunpack.c.h.b16 %v581
        %v656 = vunpack.c.l.b16 %v582
        %v657 = vunpack.c.h.b16 %v582
        %v658 = vunpack.c.l.b16 %v583
        %v659 = vunpack.c.h.b16 %v583
        %v660 = vpack.c.b16 %v656, %v652
        %v661 = vpack.c.b16 %v657, %v653
        %v662 = vpack.c.b16 %v658, %v654
        %v663 = vpack.c.b16 %v659, %v655
        %v732 = vunpack.c.l.b16 %v584
        %v733 = vunpack.c.h.b16 %v584
        %v734 = vunpack.c.l.b16 %v585
        %v735 = vunpack.c.h.b16 %v585
        %v736 = vunpack.c.l.b16 %v586
        %v737 = vunpack.c.h.b16 %v586
        %v738 = vunpack.c.l.b16 %v587
        %v739 = vunpack.c.h.b16 %v587
        %v740 = vunpack.c.l.b16 %v588
        %v741 = vunpack.c.h.b16 %v588
        %v742 = vunpack.c.l.b16 %v589
        %v743 = vunpack.c.h.b16 %v589
        %v744 = vunpack.c.l.b16 %v590
        %v745 = vunpack.c.h.b16 %v590
        %v746 = vunpack.c.l.b16 %v591
        %v747 = vunpack.c.h.b16 %v591
        %v748 = vunpack.c.l.b16 %v592
        %v749 = vunpack.c.h.b16 %v592
        %v750 = vunpack.c.l.b16 %v593
        %v751 = vunpack.c.h.b16 %v593
        %v752 = vunpack.c.l.b16 %v594
        %v753 = vunpack.c.h.b16 %v594
        %v754 = vunpack.c.l.b16 %v595
        %v755 = vunpack.c.h.b16 %v595
        %v756 = vunpack.c.l.b16 %v596
        %v757 = vunpack.c.h.b16 %v596
        %v758 = vunpack.c.l.b16 %v597
        %v759 = vunpack.c.h.b16 %v597
        %v760 = vunpack.c.l.b16 %v598
        %v761 = vunpack.c.h.b16 %v598
        %v762 = vunpack.c.l.b16 %v599
        %v763 = vunpack.c.h.b16 %v599
        %v764 = vunpack.c.l.b16 %v600
        %v765 = vunpack.c.h.b16 %v600
        %v766 = vunpack.c.l.b16 %v601
        %v767 = vunpack.c.h.b16 %v601
        %v768 = vunpack.c.l.b16 %v602
        %v769 = vunpack.c.h.b16 %v602
        %v770 = vunpack.c.l.b16 %v603
        %v771 = vunpack.c.h.b16 %v603
        %v772 = vunpack.c.l.b16 %v604
        %v773 = vunpack.c.h.b16 %v604
        %v774 = vunpack.c.l.b16 %v605
        %v775 = vunpack.c.h.b16 %v605
        %v776 = vunpack.c.l.b16 %v606
        %v777 = vunpack.c.h.b16 %v606
        %v778 = vunpack.c.l.b16 %v607
        %v779 = vunpack.c.h.b16 %v607
        %v780 = vunpack.c.l.b16 %v608
        %v781 = vunpack.c.h.b16 %v608
        %v782 = vunpack.c.l.b16 %v609
        %v783 = vunpack.c.h.b16 %v609
        %v784 = vunpack.c.l.b16 %v610
        %v785 = vunpack.c.h.b16 %v610
        %v786 = vunpack.c.l.b16 %v611
        %v787 = vunpack.c.h.b16 %v611
        %v788 = vunpack.c.l.b16 %v612
        %v789 = vunpack.c.h.b16 %v612
        %v790 = vunpack.c.l.b16 %v613
        %v791 = vunpack.c.h.b16 %v613
        %v792 = vunpack.c.l.b16 %v614
        %v793 = vunpack.c.h.b16 %v614
        %v794 = vunpack.c.l.b16 %v615
        %v795 = vunpack.c.h.b16 %v615
        %v796 = vunpack.c.l.b16 %v616
        %v797 = vunpack.c.h.b16 %v616
        %v798 = vunpack.c.l.b16 %v617
        %v799 = vunpack.c.h.b16 %v617
        %v800 = vunpack.c.l.b16 %v618
        %v801 = vunpack.c.h.b16 %v618
        %v802 = vunpack.c.l.b16 %v619
        %v803 = vunpack.c.h.b16 %v619
        %v804 = vunpack.c.l.b16 %v620
        %v805 = vunpack.c.h.b16 %v620
        %v806 = vunpack.c.l.b16 %v621
        %v807 = vunpack.c.h.b16 %v621
        %v808 = vunpack.c.l.b16 %v622
        %v809 = vunpack.c.h.b16 %v622
        %v810 = vunpack.c.l.b16 %v623
        %v811 = vunpack.c.h.b16 %v623
        %v812 = vunpack.c.l.b16 %v624
        %v813 = vunpack.c.h.b16 %v624
        %v814 = vunpack.c.l.b16 %v625
        %v815 = vunpack.c.h.b16 %v625
        %v816 = vunpack.c.l.b16 %v626
        %v817 = vunpack.c.h.b16 %v626
        %v818 = vunpack.c.l.b16 %v627
        %v819 = vunpack.c.h.b16 %v627
        %v820 = vunpack.c.l.b16 %v628
        %v821 = vunpack.c.h.b16 %v628
        %v822 = vunpack.c.l.b16 %v629
        %v823 = vunpack.c.h.b16 %v629
        %v824 = vunpack.c.l.b16 %v630
        %v825 = vunpack.c.h.b16 %v630
        %v826 = vunpack.c.l.b16 %v631
        %v827 = vunpack.c.h.b16 %v631
        %v828 = vunpack.c.l.b16 %v632
        %v829 = vunpack.c.h.b16 %v632
        %v830 = vunpack.c.l.b16 %v633
        %v831 = vunpack.c.h.b16 %v633
        %v832 = vunpack.c.l.b16 %v634
        %v833 = vunpack.c.h.b16 %v634
        %v834 = vunpack.c.l.b16 %v635
        %v835 = vunpack.c.h.b16 %v635
        %v836 = vunpack.c.l.b16 %v636
        %v837 = vunpack.c.h.b16 %v636
        %v838 = vunpack.c.l.b16 %v637
        %v839 = vunpack.c.h.b16 %v637
        %v840 = vunpack.c.l.b16 %v638
        %v841 = vunpack.c.h.b16 %v638
        %v842 = vunpack.c.l.b16 %v639
        %v843 = vunpack.c.h.b16 %v639
        %v844 = vunpack.c.l.b16 %v640
        %v845 = vunpack.c.h.b16 %v640
        %v846 = vunpack.c.l.b16 %v641
        %v847 = vunpack.c.h.b16 %v641
        %v848 = vunpack.c.l.b16 %v642
        %v849 = vunpack.c.h.b16 %v642
        %v850 = vunpack.c.l.b16 %v643
        %v851 = vunpack.c.h.b16 %v643
        %v852 = vunpack.c.l.b16 %v644
        %v853 = vunpack.c.h.b16 %v644
        %v854 = vunpack.c.l.b16 %v645
        %v855 = vunpack.c.h.b16 %v645
        %v856 = vunpack.c.l.b16 %v646
        %v857 = vunpack.c.h.b16 %v646
        %v858 = vunpack.c.l.b16 %v647
        %v859 = vunpack.c.h.b16 %v647
        %v860 = vpack.c.b16 %v734, %v732
        %v861 = vpack.c.b16 %v735, %v733
        %v862 = vpack.c.b16 %v738, %v736
        %v863 = vpack.c.b16 %v739, %v737
        %v864 = vpack.c.b16 %v742, %v740
        %v865 = vpack.c.b16 %v743, %v741
        %v866 = vpack.c.b16 %v746, %v744
        %v867 = vpack.c.b16 %v747, %v745
        %v868 = vpack.c.b16 %v750, %v748
        %v869 = vpack.c.b16 %v751, %v749
        %v870 = vpack.c.b16 %v754, %v752
        %v871 = vpack.c.b16 %v755, %v753
        %v872 = vpack.c.b16 %v758, %v756
        %v873 = vpack.c.b16 %v759, %v757
        %v874 = vpack.c.b16 %v762, %v760
        %v875 = vpack.c.b16 %v763, %v761
        %v876 = vpack.c.b16 %v766, %v764
        %v877 = vpack.c.b16 %v767, %v765
        %v878 = vpack.c.b16 %v770, %v768
        %v879 = vpack.c.b16 %v771, %v769
        %v880 = vpack.c.b16 %v774, %v772
        %v881 = vpack.c.b16 %v775, %v773
        %v882 = vpack.c.b16 %v778, %v776
        %v883 = vpack.c.b16 %v779, %v777
        %v884 = vpack.c.b16 %v782, %v780
        %v885 = vpack.c.b16 %v783, %v781
        %v886 = vpack.c.b16 %v786, %v784
        %v887 = vpack.c.b16 %v787, %v785
        %v888 = vpack.c.b16 %v790, %v788
        %v889 = vpack.c.b16 %v791, %v789
        %v890 = vpack.c.b16 %v794, %v792
        %v891 = vpack.c.b16 %v795, %v793
        %v892 = vpack.c.b16 %v798, %v796
        %v893 = vpack.c.b16 %v799, %v797
        %v894 = vpack.c.b16 %v802, %v800
        %v895 = vpack.c.b16 %v803, %v801
        %v896 = vpack.c.b16 %v806, %v804
        %v897 = vpack.c.b16 %v807, %v805
        %v898 = vpack.c.b16 %v810, %v808
        %v899 = vpack.c.b16 %v811, %v809
        %v900 = vpack.c.b16 %v814, %v812
        %v901 = vpack.c.b16 %v815, %v813
        %v902 = vpack.c.b16 %v818, %v816
        %v903 = vpack.c.b16 %v819, %v817
        %v904 = vpack.c.b16 %v822, %v820
        %v905 = vpack.c.b16 %v823, %v821
        %v906 = vpack.c.b16 %v826, %v824
        %v907 = vpack.c.b16 %v827, %v825
        %v908 = vpack.c.b16 %v830, %v828
        %v909 = vpack.c.b16 %v831, %v829
        %v910 = vpack.c.b16 %v834, %v832
        %v911 = vpack.c.b16 %v835, %v833
        %v912 = vpack.c.b16 %v838, %v836
        %v913 = vpack.c.b16 %v839, %v837
        %v914 = vpack.c.b16 %v842, %v840
        %v915 = vpack.c.b16 %v843, %v841
        %v916 = vpack.c.b16 %v846, %v844
        %v917 = vpack.c.b16 %v847, %v845
        %v918 = vpack.c.b16 %v850, %v848
        %v919 = vpack.c.b16 %v851, %v849
        %v920 = vpack.c.b16 %v854, %v852
        %v921 = vpack.c.b16 %v855, %v853
        %v922 = vpack.c.b16 %v858, %v856
        %v923 = vpack.c.b16 %v859, %v857
        %988 = vmatprep.subr.bf16.mxu0 %v875
        %989 = vmatpush1.bf16.msra.mxu0 %v874
        %990 = vmatprep.subr.bf16.mxu0 %v873
        %991 = vmatpush1.bf16.msra.mxu0 %v872
        %992 = vmatprep.subr.bf16.mxu0 %v871
        %993 = vmatpush1.bf16.msra.mxu0 %v870
        %994 = vmatprep.subr.bf16.mxu0 %v869
        %995 = vmatpush1.bf16.msra.mxu0 %v868
        %996 = vmatprep.subr.bf16.mxu0 %v867
        %997 = vmatpush1.bf16.msra.mxu0 %v866
        %998 = vmatprep.subr.bf16.mxu0 %v865
        %999 = vmatpush1.bf16.msra.mxu0 %v864
        %1000 = vmatprep.subr.bf16.mxu0 %v863
        %1001 = vmatpush1.bf16.msra.mxu0 %v862
        %1002 = vmatprep.subr.bf16.mxu0 %v861
        %1003 = vmatpush1.bf16.msra.mxu0 %v860
        %1004 = vmatprep.subr.bf16.mxu0 %v891
        %1005 = vmatpush2.bf16.msra.mxu0 %v890
        %1006 = vmatprep.subr.bf16.mxu0 %v889
        %1007 = vmatpush2.bf16.msra.mxu0 %v888
        %1008 = vmatprep.subr.bf16.mxu0 %v887
        %1009 = vmatpush2.bf16.msra.mxu0 %v886
        %1010 = vmatprep.subr.bf16.mxu0 %v885
        %1011 = vmatpush2.bf16.msra.mxu0 %v884
        %1012 = vmatprep.subr.bf16.mxu0 %v883
        %1013 = vmatpush2.bf16.msra.mxu0 %v882
        %1014 = vmatprep.subr.bf16.mxu0 %v881
        %1015 = vmatpush2.bf16.msra.mxu0 %v880
        %1016 = vmatprep.subr.bf16.mxu0 %v879
        %1017 = vmatpush2.bf16.msra.mxu0 %v878
        %1018 = vmatprep.subr.bf16.mxu0 %v877
        %1019 = vmatpush2.bf16.msra.mxu0 %v876
        %1020 = vmatprep.mubr.bf16.mxu0 %v661
        %1021 = vmatmul.mubr.bf16.gmra.mxu0 %v660
        %v1022 = vpop.f32.mrf.mxu0
        %v1023 = vadd.f32 0.0, %v1022
        %v1024 = vpop.f32.mrf.mxu0
        %v1025 = vadd.f32 0.0, %v1024
        %v1026 = vpop.f32.mrf.mxu0
        %v1027 = vadd.f32 0.0, %v1026
        %v1028 = vpop.f32.mrf.mxu0
        %v1029 = vadd.f32 0.0, %v1028
        %1030 = vdwg.mxu0
        %1031 = vmatprep.subr.bf16.mxu0 %v907
        %1032 = vmatpush1.bf16.msra.mxu0 %v906
        %1033 = vmatprep.subr.bf16.mxu0 %v905
        %1034 = vmatpush1.bf16.msra.mxu0 %v904
        %1035 = vmatprep.subr.bf16.mxu0 %v903
        %1036 = vmatpush1.bf16.msra.mxu0 %v902
        %1037 = vmatprep.subr.bf16.mxu0 %v901
        %1038 = vmatpush1.bf16.msra.mxu0 %v900
        %1039 = vmatprep.subr.bf16.mxu0 %v899
        %1040 = vmatpush1.bf16.msra.mxu0 %v898
        %1041 = vmatprep.subr.bf16.mxu0 %v897
        %1042 = vmatpush1.bf16.msra.mxu0 %v896
        %1043 = vmatprep.subr.bf16.mxu0 %v895
        %1044 = vmatpush1.bf16.msra.mxu0 %v894
        %1045 = vmatprep.subr.bf16.mxu0 %v893
        %1046 = vmatpush1.bf16.msra.mxu0 %v892
        %1047 = vmatprep.subr.bf16.mxu0 %v923
        %1048 = vmatpush2.bf16.msra.mxu0 %v922
        %1049 = vmatprep.subr.bf16.mxu0 %v921
        %1050 = vmatpush2.bf16.msra.mxu0 %v920
        %1051 = vmatprep.subr.bf16.mxu0 %v919
        %1052 = vmatpush2.bf16.msra.mxu0 %v918
        %1053 = vmatprep.subr.bf16.mxu0 %v917
        %1054 = vmatpush2.bf16.msra.mxu0 %v916
        %1055 = vmatprep.subr.bf16.mxu0 %v915
        %1056 = vmatpush2.bf16.msra.mxu0 %v914
        %1057 = vmatprep.subr.bf16.mxu0 %v913
        %1058 = vmatpush2.bf16.msra.mxu0 %v912
        %1059 = vmatprep.subr.bf16.mxu0 %v911
        %1060 = vmatpush2.bf16.msra.mxu0 %v910
        %1061 = vmatprep.subr.bf16.mxu0 %v909
        %1062 = vmatpush2.bf16.msra.mxu0 %v908
        %1063 = vmatprep.mubr.bf16.mxu0 %v663
        %1064 = vmatmul.mubr.bf16.gmra.mxu0 %v662
        %v1065 = vpop.f32.mrf.mxu0
        %v1066 = vadd.f32 %v1023, %v1065
        %v1067 = vpop.f32.mrf.mxu0
        %v1068 = vadd.f32 %v1025, %v1067
        %v1069 = vpop.f32.mrf.mxu0
        %v1070 = vadd.f32 %v1027, %v1069
        %v1071 = vpop.f32.mrf.mxu0
        %v1072 = vadd.f32 %v1029, %v1071
        %1073 = vdwg.mxu0
        %v1074 = vadd.f32 %v576, %v1066
        %v1075 = vadd.f32 %v577, %v1068
        %v1076 = vadd.f32 %v578, %v1070
        %v1077 = vadd.f32 %v579, %v1072
        %1078 = vst [vmem:[#allocation2] sm:$0xff] %v1074
        %1079 = vst [vmem:[#allocation2 + $0x8] sm:$0xff] %v1075
        %1080 = vst [vmem:[#allocation2 + $0x10] sm:$0xff] %v1076
        %1081 = vst [vmem:[#allocation2 + $0x18] sm:$0xff] %v1077
        %p1082 = scmp.eq.s32.totalorder %s37, 1
        // Predicated region
        $region97: #{tpu_custom_call.1} parent=67 // pred_check
          %p1083 = pneg %p1082
        $region98: #{tpu_custom_call.1} parent=67 // pred_check_branch
          %1085 = sbr.rel (%p1083) target = $region100
        $region99: #{tpu_custom_call.1} parent=67 // pred_region
          %v1086 = vld [vmem:[%s561] sm:$0xff]
          %v1087 = vld [vmem:[%s561 + $0x8] sm:$0xff]
          %v1088 = vlaneseq
          %v1089 = vand.u32 %v1088, 127
          %1090 = vset.pattern.permute.xlu0 0
          %1091 = vperm.xlu0 %1090, %v1086
          %v1092 = vpop.permute.xlu0 %1091
          %1093 = vset.pattern.permute.xlu0 0
          %1094 = vperm.xlu0 %1093, %v1087
          %v1095 = vpop.permute.xlu0 %1094
          %vm1096 = vcmp.eq.s32.totalorder %v1092, %v1089
          %vm1097 = vcmp.eq.s32.totalorder %v1095, %v1089
          %v1098 = vsel %vm1096, 1, 0
          %v1099 = vsel %vm1097, 1, 0
          %v1100 = vcvt.s32.f32 %v1098
          %v1101 = vcvt.s32.f32 %v1099
          %v1102 = vadd.f32 %v1100, 0.0
          %v1103 = vadd.f32 %v1101, 0.0
          %1104 = vset.pattern.permute.xlu0 1
          %1105 = vperm.xlu0 %1104, %v1086
          %v1106 = vpop.permute.xlu0 %1105
          %1107 = vset.pattern.permute.xlu0 1
          %1108 = vperm.xlu0 %1107, %v1087
          %v1109 = vpop.permute.xlu0 %1108
          %vm1110 = vcmp.eq.s32.totalorder %v1106, %v1089
          %vm1111 = vcmp.eq.s32.totalorder %v1109, %v1089
          %v1112 = vsel %vm1110, 1, 0
          %v1113 = vsel %vm1111, 1, 0
          %v1114 = vcvt.s32.f32 %v1112
          %v1115 = vcvt.s32.f32 %v1113
          %v1116 = vadd.f32 %v1102, %v1114
          %v1117 = vadd.f32 %v1103, %v1115
          %1118 = vset.pattern.permute.xlu0 2
          %1119 = vperm.xlu0 %1118, %v1086
          %v1120 = vpop.permute.xlu0 %1119
          %1121 = vset.pattern.permute.xlu0 2
          %1122 = vperm.xlu0 %1121, %v1087
          %v1123 = vpop.permute.xlu0 %1122
          %vm1124 = vcmp.eq.s32.totalorder %v1120, %v1089
          %vm1125 = vcmp.eq.s32.totalorder %v1123, %v1089
          %v1126 = vsel %vm1124, 1, 0
          %v1127 = vsel %vm1125, 1, 0
          %v1128 = vcvt.s32.f32 %v1126
          %v1129 = vcvt.s32.f32 %v1127
          %v1130 = vadd.f32 %v1116, %v1128
          %v1131 = vadd.f32 %v1117, %v1129
          %1132 = vset.pattern.permute.xlu0 3
          %1133 = vperm.xlu0 %1132, %v1086
          %v1134 = vpop.permute.xlu0 %1133
          %1135 = vset.pattern.permute.xlu0 3
          %1136 = vperm.xlu0 %1135, %v1087
          %v1137 = vpop.permute.xlu0 %1136
          %vm1138 = vcmp.eq.s32.totalorder %v1134, %v1089
          %vm1139 = vcmp.eq.s32.totalorder %v1137, %v1089
          %v1140 = vsel %vm1138, 1, 0
          %v1141 = vsel %vm1139, 1, 0
          %v1142 = vcvt.s32.f32 %v1140
          %v1143 = vcvt.s32.f32 %v1141
          %v1144 = vadd.f32 %v1130, %v1142
          %v1145 = vadd.f32 %v1131, %v1143
          %1146 = vset.pattern.permute.xlu0 4
          %1147 = vperm.xlu0 %1146, %v1086
          %v1148 = vpop.permute.xlu0 %1147
          %1149 = vset.pattern.permute.xlu0 4
          %1150 = vperm.xlu0 %1149, %v1087
          %v1151 = vpop.permute.xlu0 %1150
          %vm1152 = vcmp.eq.s32.totalorder %v1148, %v1089
          %vm1153 = vcmp.eq.s32.totalorder %v1151, %v1089
          %v1154 = vsel %vm1152, 1, 0
          %v1155 = vsel %vm1153, 1, 0
          %v1156 = vcvt.s32.f32 %v1154
          %v1157 = vcvt.s32.f32 %v1155
          %v1158 = vadd.f32 %v1144, %v1156
          %v1159 = vadd.f32 %v1145, %v1157
          %1160 = vset.pattern.permute.xlu0 5
          %1161 = vperm.xlu0 %1160, %v1086
          %v1162 = vpop.permute.xlu0 %1161
          %1163 = vset.pattern.permute.xlu0 5
          %1164 = vperm.xlu0 %1163, %v1087
          %v1165 = vpop.permute.xlu0 %1164
          %vm1166 = vcmp.eq.s32.totalorder %v1162, %v1089
          %vm1167 = vcmp.eq.s32.totalorder %v1165, %v1089
          %v1168 = vsel %vm1166, 1, 0
          %v1169 = vsel %vm1167, 1, 0
          %v1170 = vcvt.s32.f32 %v1168
          %v1171 = vcvt.s32.f32 %v1169
          %v1172 = vadd.f32 %v1158, %v1170
          %v1173 = vadd.f32 %v1159, %v1171
          %1174 = vset.pattern.permute.xlu0 6
          %1175 = vperm.xlu0 %1174, %v1086
          %v1176 = vpop.permute.xlu0 %1175
          %1177 = vset.pattern.permute.xlu0 6
          %1178 = vperm.xlu0 %1177, %v1087
          %v1179 = vpop.permute.xlu0 %1178
          %vm1180 = vcmp.eq.s32.totalorder %v1176, %v1089
          %vm1181 = vcmp.eq.s32.totalorder %v1179, %v1089
          %v1182 = vsel %vm1180, 1, 0
          %v1183 = vsel %vm1181, 1, 0
          %v1184 = vcvt.s32.f32 %v1182
          %v1185 = vcvt.s32.f32 %v1183
          %v1186 = vadd.f32 %v1172, %v1184
          %v1187 = vadd.f32 %v1173, %v1185
          %1188 = vset.pattern.permute.xlu0 7
          %1189 = vperm.xlu0 %1188, %v1086
          %v1190 = vpop.permute.xlu0 %1189
          %1191 = vset.pattern.permute.xlu0 7
          %1192 = vperm.xlu0 %1191, %v1087
          %v1193 = vpop.permute.xlu0 %1192
          %vm1194 = vcmp.eq.s32.totalorder %v1190, %v1089
          %vm1195 = vcmp.eq.s32.totalorder %v1193, %v1089
          %v1196 = vsel %vm1194, 1, 0
          %v1197 = vsel %vm1195, 1, 0
          %v1198 = vcvt.s32.f32 %v1196
          %v1199 = vcvt.s32.f32 %v1197
          %v1200 = vadd.f32 %v1186, %v1198
          %v1201 = vadd.f32 %v1187, %v1199
          %v1202 = vpack.c.bf16 %v1201, %v1200
          %v1203 = vld [vmem:[#allocation8] sm:$0xff]
          %v1204 = vld [vmem:[#allocation8 + $0x8] sm:$0xff]
          %v1205 = vld [vmem:[#allocation8 + $0x10] sm:$0xff]
          %v1206 = vld [vmem:[#allocation8 + $0x18] sm:$0xff]
          %v1207 = vld [vmem:[#allocation8 + $0x20] sm:$0xff]
          %v1208 = vld [vmem:[#allocation8 + $0x28] sm:$0xff]
          %v1209 = vld [vmem:[#allocation8 + $0x30] sm:$0xff]
          %v1210 = vld [vmem:[#allocation8 + $0x38] sm:$0xff]
          %v1211 = vld [vmem:[#allocation8 + $0x40] sm:$0xff]
          %v1212 = vld [vmem:[#allocation8 + $0x48] sm:$0xff]
          %v1213 = vld [vmem:[#allocation8 + $0x50] sm:$0xff]
          %v1214 = vld [vmem:[#allocation8 + $0x58] sm:$0xff]
          %v1215 = vld [vmem:[#allocation8 + $0x60] sm:$0xff]
          %v1216 = vld [vmem:[#allocation8 + $0x68] sm:$0xff]
          %v1217 = vld [vmem:[#allocation8 + $0x70] sm:$0xff]
          %v1218 = vld [vmem:[#allocation8 + $0x78] sm:$0xff]
          %v1235 = vunpack.c.l.b16 %v1203
          %v1236 = vunpack.c.h.b16 %v1203
          %v1237 = vunpack.c.l.b16 %v1204
          %v1238 = vunpack.c.h.b16 %v1204
          %v1239 = vunpack.c.l.b16 %v1205
          %v1240 = vunpack.c.h.b16 %v1205
          %v1241 = vunpack.c.l.b16 %v1206
          %v1242 = vunpack.c.h.b16 %v1206
          %v1243 = vunpack.c.l.b16 %v1207
          %v1244 = vunpack.c.h.b16 %v1207
          %v1245 = vunpack.c.l.b16 %v1208
          %v1246 = vunpack.c.h.b16 %v1208
          %v1247 = vunpack.c.l.b16 %v1209
          %v1248 = vunpack.c.h.b16 %v1209
          %v1249 = vunpack.c.l.b16 %v1210
          %v1250 = vunpack.c.h.b16 %v1210
          %v1251 = vunpack.c.l.b16 %v1211
          %v1252 = vunpack.c.h.b16 %v1211
          %v1253 = vunpack.c.l.b16 %v1212
          %v1254 = vunpack.c.h.b16 %v1212
          %v1255 = vunpack.c.l.b16 %v1213
          %v1256 = vunpack.c.h.b16 %v1213
          %v1257 = vunpack.c.l.b16 %v1214
          %v1258 = vunpack.c.h.b16 %v1214
          %v1259 = vunpack.c.l.b16 %v1215
          %v1260 = vunpack.c.h.b16 %v1215
          %v1261 = vunpack.c.l.b16 %v1216
          %v1262 = vunpack.c.h.b16 %v1216
          %v1263 = vunpack.c.l.b16 %v1217
          %v1264 = vunpack.c.h.b16 %v1217
          %v1265 = vunpack.c.l.b16 %v1218
          %v1266 = vunpack.c.h.b16 %v1218
          %v1267 = vpack.c.b16 %v1237, %v1235
          %v1268 = vpack.c.b16 %v1238, %v1236
          %v1269 = vpack.c.b16 %v1241, %v1239
          %v1270 = vpack.c.b16 %v1242, %v1240
          %v1271 = vpack.c.b16 %v1245, %v1243
          %v1272 = vpack.c.b16 %v1246, %v1244
          %v1273 = vpack.c.b16 %v1249, %v1247
          %v1274 = vpack.c.b16 %v1250, %v1248
          %v1275 = vpack.c.b16 %v1253, %v1251
          %v1276 = vpack.c.b16 %v1254, %v1252
          %v1277 = vpack.c.b16 %v1257, %v1255
          %v1278 = vpack.c.b16 %v1258, %v1256
          %v1279 = vpack.c.b16 %v1261, %v1259
          %v1280 = vpack.c.b16 %v1262, %v1260
          %v1281 = vpack.c.b16 %v1265, %v1263
          %v1282 = vpack.c.b16 %v1266, %v1264
          %1299 = vmatprep.subr.bf16.mxu0 %v1282
          %1300 = vmatpush1.bf16.msra.mxu0 %v1281
          %1301 = vmatprep.subr.bf16.mxu0 %v1280
          %1302 = vmatpush1.bf16.msra.mxu0 %v1279
          %1303 = vmatprep.subr.bf16.mxu0 %v1278
          %1304 = vmatpush1.bf16.msra.mxu0 %v1277
          %1305 = vmatprep.subr.bf16.mxu0 %v1276
          %1306 = vmatpush1.bf16.msra.mxu0 %v1275
          %1307 = vmatprep.subr.bf16.mxu0 %v1274
          %1308 = vmatpush1.bf16.msra.mxu0 %v1273
          %1309 = vmatprep.subr.bf16.mxu0 %v1272
          %1310 = vmatpush1.bf16.msra.mxu0 %v1271
          %1311 = vmatprep.subr.bf16.mxu0 %v1270
          %1312 = vmatpush1.bf16.msra.mxu0 %v1269
          %1313 = vmatprep.subr.bf16.mxu0 %v1268
          %1314 = vmatpush1.bf16.msra.mxu0 %v1267
          %1315 = vmatprep.subr.bf16.mxu0 0
          %1316 = vmatpush2.bf16.msra.mxu0 0
          %1317 = vmatprep.subr.bf16.mxu0 0
          %1318 = vmatpush2.bf16.msra.mxu0 0
          %1319 = vmatprep.subr.bf16.mxu0 0
          %1320 = vmatpush2.bf16.msra.mxu0 0
          %1321 = vmatprep.subr.bf16.mxu0 0
          %1322 = vmatpush2.bf16.msra.mxu0 0
          %1323 = vmatprep.subr.bf16.mxu0 0
          %1324 = vmatpush2.bf16.msra.mxu0 0
          %1325 = vmatprep.subr.bf16.mxu0 0
          %1326 = vmatpush2.bf16.msra.mxu0 0
          %1327 = vmatprep.subr.bf16.mxu0 0
          %1328 = vmatpush2.bf16.msra.mxu0 0
          %1329 = vmatprep.subr.bf16.mxu0 0
          %1330 = vmatpush2.bf16.msra.mxu0 0
          %1331 = vmatprep.mubr.bf16.mxu0 0
          %1332 = vmatmul.mubr.bf16.gmra.mxu0 %v1202
          %v1333 = vpop.f32.mrf.mxu0
          %v1334 = vadd.f32 0.0, %v1333
          %v1335 = vpop.f32.mrf.mxu0
          %v1336 = vadd.f32 0.0, %v1335
          %v1337 = vpop.f32.mrf.mxu0
          %v1338 = vadd.f32 0.0, %v1337
          %v1339 = vpop.f32.mrf.mxu0
          %v1340 = vadd.f32 0.0, %v1339
          %1341 = vdwg.mxu0
          %v1342 = vmul.f32 %v1334, 0.125
          %v1343 = vmul.f32 %v1336, 0.125
          %v1344 = vmul.f32 %v1338, 0.125
          %v1345 = vmul.f32 %v1340, 0.125
          %v1346 = vld [vmem:[%s5] sm:$0x3]
          %v1348 = vlaneseq
          %v1349 = vshrl.u32 %v1348, 7
          %v1350 = vsub.s32 0, %v1349
          %v1351 = vrot.slane %v1346, %v1350
          %v1352 = vlaneseq
          %v1353 = vshrl.u32 %v1352, 7
          %v1354 = vsub.s32 1, %v1353
          %v1355 = vrot.slane %v1346, %v1354
          %v1358 = vadd.f32 %v1342, %v1351
          %v1359 = vadd.f32 %v1343, %v1355
          %v1360 = vadd.f32 %v1344, %v1351
          %v1361 = vadd.f32 %v1345, %v1355
          %v1362 = vld [vmem:[#allocation2] sm:$0xff]
          %v1363 = vld [vmem:[#allocation2 + $0x8] sm:$0xff]
          %v1364 = vld [vmem:[#allocation2 + $0x10] sm:$0xff]
          %v1365 = vld [vmem:[#allocation2 + $0x18] sm:$0xff]
          %v1366 = vld [vmem:[%s3] sm:$0x3]
          %v1368 = vlaneseq
          %v1369 = vshrl.u32 %v1368, 7
          %v1370 = vsub.s32 0, %v1369
          %v1371 = vrot.slane %v1366, %v1370
          %v1372 = vlaneseq
          %v1373 = vshrl.u32 %v1372, 7
          %v1374 = vsub.s32 1, %v1373
          %v1375 = vrot.slane %v1366, %v1374
          %v1378 = vadd.f32 %v1362, %v1371
          %v1379 = vadd.f32 %v1363, %v1375
          %v1380 = vadd.f32 %v1364, %v1371
          %v1381 = vadd.f32 %v1365, %v1375
          %v1382 = vmul.f32 %v1378, %v1358
          %v1383 = vmul.f32 %v1379, %v1359
          %v1384 = vmul.f32 %v1380, %v1360
          %v1385 = vmul.f32 %v1381, %v1361
          %v1386 = vpack.c.bf16 %v1384, %v1382
          %v1387 = vpack.c.bf16 %v1385, %v1383
          %v1388 = vld [vmem:[#allocation9] sm:$0xff]
          %v1389 = vld [vmem:[#allocation9 + $0x8] sm:$0xff]
          %v1390 = vld [vmem:[#allocation9 + $0x10] sm:$0xff]
          %v1391 = vld [vmem:[#allocation9 + $0x18] sm:$0xff]
          %v1392 = vld [vmem:[#allocation9 + $0x20] sm:$0xff]
          %v1393 = vld [vmem:[#allocation9 + $0x28] sm:$0xff]
          %v1394 = vld [vmem:[#allocation9 + $0x30] sm:$0xff]
          %v1395 = vld [vmem:[#allocation9 + $0x38] sm:$0xff]
          %v1396 = vld [vmem:[#allocation9 + $0x40] sm:$0xff]
          %v1397 = vld [vmem:[#allocation9 + $0x48] sm:$0xff]
          %v1398 = vld [vmem:[#allocation9 + $0x50] sm:$0xff]
          %v1399 = vld [vmem:[#allocation9 + $0x58] sm:$0xff]
          %v1400 = vld [vmem:[#allocation9 + $0x60] sm:$0xff]
          %v1401 = vld [vmem:[#allocation9 + $0x68] sm:$0xff]
          %v1402 = vld [vmem:[#allocation9 + $0x70] sm:$0xff]
          %v1403 = vld [vmem:[#allocation9 + $0x78] sm:$0xff]
          %v1404 = vld [vmem:[#allocation9 + $0x80] sm:$0xff]
          %v1405 = vld [vmem:[#allocation9 + $0x88] sm:$0xff]
          %v1406 = vld [vmem:[#allocation9 + $0x90] sm:$0xff]
          %v1407 = vld [vmem:[#allocation9 + $0x98] sm:$0xff]
          %v1408 = vld [vmem:[#allocation9 + $0xa0] sm:$0xff]
          %v1409 = vld [vmem:[#allocation9 + $0xa8] sm:$0xff]
          %v1410 = vld [vmem:[#allocation9 + $0xb0] sm:$0xff]
          %v1411 = vld [vmem:[#allocation9 + $0xb8] sm:$0xff]
          %v1412 = vld [vmem:[#allocation9 + $0xc0] sm:$0xff]
          %v1413 = vld [vmem:[#allocation9 + $0xc8] sm:$0xff]
          %v1414 = vld [vmem:[#allocation9 + $0xd0] sm:$0xff]
          %v1415 = vld [vmem:[#allocation9 + $0xd8] sm:$0xff]
          %v1416 = vld [vmem:[#allocation9 + $0xe0] sm:$0xff]
          %v1417 = vld [vmem:[#allocation9 + $0xe8] sm:$0xff]
          %v1418 = vld [vmem:[#allocation9 + $0xf0] sm:$0xff]
          %v1419 = vld [vmem:[#allocation9 + $0xf8] sm:$0xff]
          %v1420 = vld [vmem:[#allocation9 + $0x100] sm:$0xff]
          %v1421 = vld [vmem:[#allocation9 + $0x108] sm:$0xff]
          %v1422 = vld [vmem:[#allocation9 + $0x110] sm:$0xff]
          %v1423 = vld [vmem:[#allocation9 + $0x118] sm:$0xff]
          %v1424 = vld [vmem:[#allocation9 + $0x120] sm:$0xff]
          %v1425 = vld [vmem:[#allocation9 + $0x128] sm:$0xff]
          %v1426 = vld [vmem:[#allocation9 + $0x130] sm:$0xff]
          %v1427 = vld [vmem:[#allocation9 + $0x138] sm:$0xff]
          %v1428 = vld [vmem:[#allocation9 + $0x140] sm:$0xff]
          %v1429 = vld [vmem:[#allocation9 + $0x148] sm:$0xff]
          %v1430 = vld [vmem:[#allocation9 + $0x150] sm:$0xff]
          %v1431 = vld [vmem:[#allocation9 + $0x158] sm:$0xff]
          %v1432 = vld [vmem:[#allocation9 + $0x160] sm:$0xff]
          %v1433 = vld [vmem:[#allocation9 + $0x168] sm:$0xff]
          %v1434 = vld [vmem:[#allocation9 + $0x170] sm:$0xff]
          %v1435 = vld [vmem:[#allocation9 + $0x178] sm:$0xff]
          %v1436 = vld [vmem:[#allocation9 + $0x180] sm:$0xff]
          %v1437 = vld [vmem:[#allocation9 + $0x188] sm:$0xff]
          %v1438 = vld [vmem:[#allocation9 + $0x190] sm:$0xff]
          %v1439 = vld [vmem:[#allocation9 + $0x198] sm:$0xff]
          %v1440 = vld [vmem:[#allocation9 + $0x1a0] sm:$0xff]
          %v1441 = vld [vmem:[#allocation9 + $0x1a8] sm:$0xff]
          %v1442 = vld [vmem:[#allocation9 + $0x1b0] sm:$0xff]
          %v1443 = vld [vmem:[#allocation9 + $0x1b8] sm:$0xff]
          %v1444 = vld [vmem:[#allocation9 + $0x1c0] sm:$0xff]
          %v1445 = vld [vmem:[#allocation9 + $0x1c8] sm:$0xff]
          %v1446 = vld [vmem:[#allocation9 + $0x1d0] sm:$0xff]
          %v1447 = vld [vmem:[#allocation9 + $0x1d8] sm:$0xff]
          %v1448 = vld [vmem:[#allocation9 + $0x1e0] sm:$0xff]
          %v1449 = vld [vmem:[#allocation9 + $0x1e8] sm:$0xff]
          %v1450 = vld [vmem:[#allocation9 + $0x1f0] sm:$0xff]
          %v1451 = vld [vmem:[#allocation9 + $0x1f8] sm:$0xff]
          %v1452 = vld [vmem:[%s7] sm:$0xf]
          %v1454 = vlaneseq
          %v1455 = vshrl.u32 %v1454, 7
          %v1456 = vsub.s32 0, %v1455
          %v1457 = vrot.slane %v1452, %v1456
          %v1458 = vlaneseq
          %v1459 = vshrl.u32 %v1458, 7
          %v1460 = vsub.s32 1, %v1459
          %v1461 = vrot.slane %v1452, %v1460
          %v1462 = vlaneseq
          %v1463 = vshrl.u32 %v1462, 7
          %v1464 = vsub.s32 2, %v1463
          %v1465 = vrot.slane %v1452, %v1464
          %v1466 = vlaneseq
          %v1467 = vshrl.u32 %v1466, 7
          %v1468 = vsub.s32 3, %v1467
          %v1469 = vrot.slane %v1452, %v1468
          %v1538 = vunpack.c.l.b16 %v1388
          %v1539 = vunpack.c.h.b16 %v1388
          %v1540 = vunpack.c.l.b16 %v1389
          %v1541 = vunpack.c.h.b16 %v1389
          %v1542 = vunpack.c.l.b16 %v1390
          %v1543 = vunpack.c.h.b16 %v1390
          %v1544 = vunpack.c.l.b16 %v1391
          %v1545 = vunpack.c.h.b16 %v1391
          %v1546 = vunpack.c.l.b16 %v1392
          %v1547 = vunpack.c.h.b16 %v1392
          %v1548 = vunpack.c.l.b16 %v1393
          %v1549 = vunpack.c.h.b16 %v1393
          %v1550 = vunpack.c.l.b16 %v1394
          %v1551 = vunpack.c.h.b16 %v1394
          %v1552 = vunpack.c.l.b16 %v1395
          %v1553 = vunpack.c.h.b16 %v1395
          %v1554 = vunpack.c.l.b16 %v1396
          %v1555 = vunpack.c.h.b16 %v1396
          %v1556 = vunpack.c.l.b16 %v1397
          %v1557 = vunpack.c.h.b16 %v1397
          %v1558 = vunpack.c.l.b16 %v1398
          %v1559 = vunpack.c.h.b16 %v1398
          %v1560 = vunpack.c.l.b16 %v1399
          %v1561 = vunpack.c.h.b16 %v1399
          %v1562 = vunpack.c.l.b16 %v1400
          %v1563 = vunpack.c.h.b16 %v1400
          %v1564 = vunpack.c.l.b16 %v1401
          %v1565 = vunpack.c.h.b16 %v1401
          %v1566 = vunpack.c.l.b16 %v1402
          %v1567 = vunpack.c.h.b16 %v1402
          %v1568 = vunpack.c.l.b16 %v1403
          %v1569 = vunpack.c.h.b16 %v1403
          %v1570 = vunpack.c.l.b16 %v1404
          %v1571 = vunpack.c.h.b16 %v1404
          %v1572 = vunpack.c.l.b16 %v1405
          %v1573 = vunpack.c.h.b16 %v1405
          %v1574 = vunpack.c.l.b16 %v1406
          %v1575 = vunpack.c.h.b16 %v1406
          %v1576 = vunpack.c.l.b16 %v1407
          %v1577 = vunpack.c.h.b16 %v1407
          %v1578 = vunpack.c.l.b16 %v1408
          %v1579 = vunpack.c.h.b16 %v1408
          %v1580 = vunpack.c.l.b16 %v1409
          %v1581 = vunpack.c.h.b16 %v1409
          %v1582 = vunpack.c.l.b16 %v1410
          %v1583 = vunpack.c.h.b16 %v1410
          %v1584 = vunpack.c.l.b16 %v1411
          %v1585 = vunpack.c.h.b16 %v1411
          %v1586 = vunpack.c.l.b16 %v1412
          %v1587 = vunpack.c.h.b16 %v1412
          %v1588 = vunpack.c.l.b16 %v1413
          %v1589 = vunpack.c.h.b16 %v1413
          %v1590 = vunpack.c.l.b16 %v1414
          %v1591 = vunpack.c.h.b16 %v1414
          %v1592 = vunpack.c.l.b16 %v1415
          %v1593 = vunpack.c.h.b16 %v1415
          %v1594 = vunpack.c.l.b16 %v1416
          %v1595 = vunpack.c.h.b16 %v1416
          %v1596 = vunpack.c.l.b16 %v1417
          %v1597 = vunpack.c.h.b16 %v1417
          %v1598 = vunpack.c.l.b16 %v1418
          %v1599 = vunpack.c.h.b16 %v1418
          %v1600 = vunpack.c.l.b16 %v1419
          %v1601 = vunpack.c.h.b16 %v1419
          %v1602 = vunpack.c.l.b16 %v1420
          %v1603 = vunpack.c.h.b16 %v1420
          %v1604 = vunpack.c.l.b16 %v1421
          %v1605 = vunpack.c.h.b16 %v1421
          %v1606 = vunpack.c.l.b16 %v1422
          %v1607 = vunpack.c.h.b16 %v1422
          %v1608 = vunpack.c.l.b16 %v1423
          %v1609 = vunpack.c.h.b16 %v1423
          %v1610 = vunpack.c.l.b16 %v1424
          %v1611 = vunpack.c.h.b16 %v1424
          %v1612 = vunpack.c.l.b16 %v1425
          %v1613 = vunpack.c.h.b16 %v1425
          %v1614 = vunpack.c.l.b16 %v1426
          %v1615 = vunpack.c.h.b16 %v1426
          %v1616 = vunpack.c.l.b16 %v1427
          %v1617 = vunpack.c.h.b16 %v1427
          %v1618 = vunpack.c.l.b16 %v1428
          %v1619 = vunpack.c.h.b16 %v1428
          %v1620 = vunpack.c.l.b16 %v1429
          %v1621 = vunpack.c.h.b16 %v1429
          %v1622 = vunpack.c.l.b16 %v1430
          %v1623 = vunpack.c.h.b16 %v1430
          %v1624 = vunpack.c.l.b16 %v1431
          %v1625 = vunpack.c.h.b16 %v1431
          %v1626 = vunpack.c.l.b16 %v1432
          %v1627 = vunpack.c.h.b16 %v1432
          %v1628 = vunpack.c.l.b16 %v1433
          %v1629 = vunpack.c.h.b16 %v1433
          %v1630 = vunpack.c.l.b16 %v1434
          %v1631 = vunpack.c.h.b16 %v1434
          %v1632 = vunpack.c.l.b16 %v1435
          %v1633 = vunpack.c.h.b16 %v1435
          %v1634 = vunpack.c.l.b16 %v1436
          %v1635 = vunpack.c.h.b16 %v1436
          %v1636 = vunpack.c.l.b16 %v1437
          %v1637 = vunpack.c.h.b16 %v1437
          %v1638 = vunpack.c.l.b16 %v1438
          %v1639 = vunpack.c.h.b16 %v1438
          %v1640 = vunpack.c.l.b16 %v1439
          %v1641 = vunpack.c.h.b16 %v1439
          %v1642 = vunpack.c.l.b16 %v1440
          %v1643 = vunpack.c.h.b16 %v1440
          %v1644 = vunpack.c.l.b16 %v1441
          %v1645 = vunpack.c.h.b16 %v1441
          %v1646 = vunpack.c.l.b16 %v1442
          %v1647 = vunpack.c.h.b16 %v1442
          %v1648 = vunpack.c.l.b16 %v1443
          %v1649 = vunpack.c.h.b16 %v1443
          %v1650 = vunpack.c.l.b16 %v1444
          %v1651 = vunpack.c.h.b16 %v1444
          %v1652 = vunpack.c.l.b16 %v1445
          %v1653 = vunpack.c.h.b16 %v1445
          %v1654 = vunpack.c.l.b16 %v1446
          %v1655 = vunpack.c.h.b16 %v1446
          %v1656 = vunpack.c.l.b16 %v1447
          %v1657 = vunpack.c.h.b16 %v1447
          %v1658 = vunpack.c.l.b16 %v1448
          %v1659 = vunpack.c.h.b16 %v1448
          %v1660 = vunpack.c.l.b16 %v1449
          %v1661 = vunpack.c.h.b16 %v1449
          %v1662 = vunpack.c.l.b16 %v1450
          %v1663 = vunpack.c.h.b16 %v1450
          %v1664 = vunpack.c.l.b16 %v1451
          %v1665 = vunpack.c.h.b16 %v1451
          %v1666 = vpack.c.b16 %v1542, %v1538
          %v1667 = vpack.c.b16 %v1543, %v1539
          %v1668 = vpack.c.b16 %v1544, %v1540
          %v1669 = vpack.c.b16 %v1545, %v1541
          %v1670 = vpack.c.b16 %v1550, %v1546
          %v1671 = vpack.c.b16 %v1551, %v1547
          %v1672 = vpack.c.b16 %v1552, %v1548
          %v1673 = vpack.c.b16 %v1553, %v1549
          %v1674 = vpack.c.b16 %v1558, %v1554
          %v1675 = vpack.c.b16 %v1559, %v1555
          %v1676 = vpack.c.b16 %v1560, %v1556
          %v1677 = vpack.c.b16 %v1561, %v1557
          %v1678 = vpack.c.b16 %v1566, %v1562
          %v1679 = vpack.c.b16 %v1567, %v1563
          %v1680 = vpack.c.b16 %v1568, %v1564
          %v1681 = vpack.c.b16 %v1569, %v1565
          %v1682 = vpack.c.b16 %v1574, %v1570
          %v1683 = vpack.c.b16 %v1575, %v1571
          %v1684 = vpack.c.b16 %v1576, %v1572
          %v1685 = vpack.c.b16 %v1577, %v1573
          %v1686 = vpack.c.b16 %v1582, %v1578
          %v1687 = vpack.c.b16 %v1583, %v1579
          %v1688 = vpack.c.b16 %v1584, %v1580
          %v1689 = vpack.c.b16 %v1585, %v1581
          %v1690 = vpack.c.b16 %v1590, %v1586
          %v1691 = vpack.c.b16 %v1591, %v1587
          %v1692 = vpack.c.b16 %v1592, %v1588
          %v1693 = vpack.c.b16 %v1593, %v1589
          %v1694 = vpack.c.b16 %v1598, %v1594
          %v1695 = vpack.c.b16 %v1599, %v1595
          %v1696 = vpack.c.b16 %v1600, %v1596
          %v1697 = vpack.c.b16 %v1601, %v1597
          %v1698 = vpack.c.b16 %v1606, %v1602
          %v1699 = vpack.c.b16 %v1607, %v1603
          %v1700 = vpack.c.b16 %v1608, %v1604
          %v1701 = vpack.c.b16 %v1609, %v1605
          %v1702 = vpack.c.b16 %v1614, %v1610
          %v1703 = vpack.c.b16 %v1615, %v1611
          %v1704 = vpack.c.b16 %v1616, %v1612
          %v1705 = vpack.c.b16 %v1617, %v1613
          %v1706 = vpack.c.b16 %v1622, %v1618
          %v1707 = vpack.c.b16 %v1623, %v1619
          %v1708 = vpack.c.b16 %v1624, %v1620
          %v1709 = vpack.c.b16 %v1625, %v1621
          %v1710 = vpack.c.b16 %v1630, %v1626
          %v1711 = vpack.c.b16 %v1631, %v1627
          %v1712 = vpack.c.b16 %v1632, %v1628
          %v1713 = vpack.c.b16 %v1633, %v1629
          %v1714 = vpack.c.b16 %v1638, %v1634
          %v1715 = vpack.c.b16 %v1639, %v1635
          %v1716 = vpack.c.b16 %v1640, %v1636
          %v1717 = vpack.c.b16 %v1641, %v1637
          %v1718 = vpack.c.b16 %v1646, %v1642
          %v1719 = vpack.c.b16 %v1647, %v1643
          %v1720 = vpack.c.b16 %v1648, %v1644
          %v1721 = vpack.c.b16 %v1649, %v1645
          %v1722 = vpack.c.b16 %v1654, %v1650
          %v1723 = vpack.c.b16 %v1655, %v1651
          %v1724 = vpack.c.b16 %v1656, %v1652
          %v1725 = vpack.c.b16 %v1657, %v1653
          %v1726 = vpack.c.b16 %v1662, %v1658
          %v1727 = vpack.c.b16 %v1663, %v1659
          %v1728 = vpack.c.b16 %v1664, %v1660
          %v1729 = vpack.c.b16 %v1665, %v1661
          %1794 = vmatprep.subr.bf16.mxu0 %v1695
          %1795 = vmatpush1.bf16.msra.mxu0 %v1694
          %1796 = vmatprep.subr.bf16.mxu0 %v1691
          %1797 = vmatpush1.bf16.msra.mxu0 %v1690
          %1798 = vmatprep.subr.bf16.mxu0 %v1687
          %1799 = vmatpush1.bf16.msra.mxu0 %v1686
          %1800 = vmatprep.subr.bf16.mxu0 %v1683
          %1801 = vmatpush1.bf16.msra.mxu0 %v1682
          %1802 = vmatprep.subr.bf16.mxu0 %v1679
          %1803 = vmatpush1.bf16.msra.mxu0 %v1678
          %1804 = vmatprep.subr.bf16.mxu0 %v1675
          %1805 = vmatpush1.bf16.msra.mxu0 %v1674
          %1806 = vmatprep.subr.bf16.mxu0 %v1671
          %1807 = vmatpush1.bf16.msra.mxu0 %v1670
          %1808 = vmatprep.subr.bf16.mxu0 %v1667
          %1809 = vmatpush1.bf16.msra.mxu0 %v1666
          %1810 = vmatprep.subr.bf16.mxu0 %v1727
          %1811 = vmatpush2.bf16.msra.mxu0 %v1726
          %1812 = vmatprep.subr.bf16.mxu0 %v1723
          %1813 = vmatpush2.bf16.msra.mxu0 %v1722
          %1814 = vmatprep.subr.bf16.mxu0 %v1719
          %1815 = vmatpush2.bf16.msra.mxu0 %v1718
          %1816 = vmatprep.subr.bf16.mxu0 %v1715
          %1817 = vmatpush2.bf16.msra.mxu0 %v1714
          %1818 = vmatprep.subr.bf16.mxu0 %v1711
          %1819 = vmatpush2.bf16.msra.mxu0 %v1710
          %1820 = vmatprep.subr.bf16.mxu0 %v1707
          %1821 = vmatpush2.bf16.msra.mxu0 %v1706
          %1822 = vmatprep.subr.bf16.mxu0 %v1703
          %1823 = vmatpush2.bf16.msra.mxu0 %v1702
          %1824 = vmatprep.subr.bf16.mxu0 %v1699
          %1825 = vmatpush2.bf16.msra.mxu0 %v1698
          %1826 = vmatprep.mubr.bf16.mxu0 %v1387
          %1827 = vmatmul.mubr.bf16.gmra.mxu0 %v1386
          %v1828 = vpop.f32.mrf.mxu0
          %v1829 = vadd.f32 %v1457, %v1828
          %v1830 = vpop.f32.mrf.mxu0
          %v1831 = vadd.f32 %v1461, %v1830
          %v1832 = vpop.f32.mrf.mxu0
          %v1833 = vadd.f32 %v1457, %v1832
          %v1834 = vpop.f32.mrf.mxu0
          %v1835 = vadd.f32 %v1461, %v1834
          %1836 = vdwg.mxu0
          %1837 = vmatprep.subr.bf16.mxu0 %v1697
          %1838 = vmatpush1.bf16.msra.mxu0 %v1696
          %1839 = vmatprep.subr.bf16.mxu0 %v1693
          %1840 = vmatpush1.bf16.msra.mxu0 %v1692
          %1841 = vmatprep.subr.bf16.mxu0 %v1689
          %1842 = vmatpush1.bf16.msra.mxu0 %v1688
          %1843 = vmatprep.subr.bf16.mxu0 %v1685
          %1844 = vmatpush1.bf16.msra.mxu0 %v1684
          %1845 = vmatprep.subr.bf16.mxu0 %v1681
          %1846 = vmatpush1.bf16.msra.mxu0 %v1680
          %1847 = vmatprep.subr.bf16.mxu0 %v1677
          %1848 = vmatpush1.bf16.msra.mxu0 %v1676
          %1849 = vmatprep.subr.bf16.mxu0 %v1673
          %1850 = vmatpush1.bf16.msra.mxu0 %v1672
          %1851 = vmatprep.subr.bf16.mxu0 %v1669
          %1852 = vmatpush1.bf16.msra.mxu0 %v1668
          %1853 = vmatprep.subr.bf16.mxu0 %v1729
          %1854 = vmatpush2.bf16.msra.mxu0 %v1728
          %1855 = vmatprep.subr.bf16.mxu0 %v1725
          %1856 = vmatpush2.bf16.msra.mxu0 %v1724
          %1857 = vmatprep.subr.bf16.mxu0 %v1721
          %1858 = vmatpush2.bf16.msra.mxu0 %v1720
          %1859 = vmatprep.subr.bf16.mxu0 %v1717
          %1860 = vmatpush2.bf16.msra.mxu0 %v1716
          %1861 = vmatprep.subr.bf16.mxu0 %v1713
          %1862 = vmatpush2.bf16.msra.mxu0 %v1712
          %1863 = vmatprep.subr.bf16.mxu0 %v1709
          %1864 = vmatpush2.bf16.msra.mxu0 %v1708
          %1865 = vmatprep.subr.bf16.mxu0 %v1705
          %1866 = vmatpush2.bf16.msra.mxu0 %v1704
          %1867 = vmatprep.subr.bf16.mxu0 %v1701
          %1868 = vmatpush2.bf16.msra.mxu0 %v1700
          %1869 = vmatprep.mubr.bf16.mxu0 %v1387
          %1870 = vmatmul.mubr.bf16.gmra.mxu0 %v1386
          %v1871 = vpop.f32.mrf.mxu0
          %v1872 = vadd.f32 %v1465, %v1871
          %v1873 = vpop.f32.mrf.mxu0
          %v1874 = vadd.f32 %v1469, %v1873
          %v1875 = vpop.f32.mrf.mxu0
          %v1876 = vadd.f32 %v1465, %v1875
          %v1877 = vpop.f32.mrf.mxu0
          %v1878 = vadd.f32 %v1469, %v1877
          %1879 = vdwg.mxu0
          %v1880 = vmax.f32 %v1829, 0.0
          %v1881 = vmax.f32 %v1831, 0.0
          %v1882 = vmax.f32 %v1872, 0.0
          %v1883 = vmax.f32 %v1874, 0.0
          %v1884 = vmax.f32 %v1833, 0.0
          %v1885 = vmax.f32 %v1835, 0.0
          %v1886 = vmax.f32 %v1876, 0.0
          %v1887 = vmax.f32 %v1878, 0.0
          %v1888 = vpack.c.bf16 %v1884, %v1880
          %v1889 = vpack.c.bf16 %v1885, %v1881
          %v1890 = vpack.c.bf16 %v1886, %v1882
          %v1891 = vpack.c.bf16 %v1887, %v1883
          %v1892 = vld [vmem:[#allocation11] sm:$0xff]
          %v1893 = vld [vmem:[#allocation11 + $0x8] sm:$0xff]
          %v1894 = vld [vmem:[#allocation11 + $0x10] sm:$0xff]
          %v1895 = vld [vmem:[#allocation11 + $0x18] sm:$0xff]
          %v1896 = vld [vmem:[#allocation11 + $0x20] sm:$0xff]
          %v1897 = vld [vmem:[#allocation11 + $0x28] sm:$0xff]
          %v1898 = vld [vmem:[#allocation11 + $0x30] sm:$0xff]
          %v1899 = vld [vmem:[#allocation11 + $0x38] sm:$0xff]
          %v1900 = vld [vmem:[#allocation11 + $0x40] sm:$0xff]
          %v1901 = vld [vmem:[#allocation11 + $0x48] sm:$0xff]
          %v1902 = vld [vmem:[#allocation11 + $0x50] sm:$0xff]
          %v1903 = vld [vmem:[#allocation11 + $0x58] sm:$0xff]
          %v1904 = vld [vmem:[#allocation11 + $0x60] sm:$0xff]
          %v1905 = vld [vmem:[#allocation11 + $0x68] sm:$0xff]
          %v1906 = vld [vmem:[#allocation11 + $0x70] sm:$0xff]
          %v1907 = vld [vmem:[#allocation11 + $0x78] sm:$0xff]
          %v1908 = vld [vmem:[#allocation11 + $0x80] sm:$0xff]
          %v1909 = vld [vmem:[#allocation11 + $0x88] sm:$0xff]
          %v1910 = vld [vmem:[#allocation11 + $0x90] sm:$0xff]
          %v1911 = vld [vmem:[#allocation11 + $0x98] sm:$0xff]
          %v1912 = vld [vmem:[#allocation11 + $0xa0] sm:$0xff]
          %v1913 = vld [vmem:[#allocation11 + $0xa8] sm:$0xff]
          %v1914 = vld [vmem:[#allocation11 + $0xb0] sm:$0xff]
          %v1915 = vld [vmem:[#allocation11 + $0xb8] sm:$0xff]
          %v1916 = vld [vmem:[#allocation11 + $0xc0] sm:$0xff]
          %v1917 = vld [vmem:[#allocation11 + $0xc8] sm:$0xff]
          %v1918 = vld [vmem:[#allocation11 + $0xd0] sm:$0xff]
          %v1919 = vld [vmem:[#allocation11 + $0xd8] sm:$0xff]
          %v1920 = vld [vmem:[#allocation11 + $0xe0] sm:$0xff]
          %v1921 = vld [vmem:[#allocation11 + $0xe8] sm:$0xff]
          %v1922 = vld [vmem:[#allocation11 + $0xf0] sm:$0xff]
          %v1923 = vld [vmem:[#allocation11 + $0xf8] sm:$0xff]
          %v1924 = vld [vmem:[#allocation11 + $0x100] sm:$0xff]
          %v1925 = vld [vmem:[#allocation11 + $0x108] sm:$0xff]
          %v1926 = vld [vmem:[#allocation11 + $0x110] sm:$0xff]
          %v1927 = vld [vmem:[#allocation11 + $0x118] sm:$0xff]
          %v1928 = vld [vmem:[#allocation11 + $0x120] sm:$0xff]
          %v1929 = vld [vmem:[#allocation11 + $0x128] sm:$0xff]
          %v1930 = vld [vmem:[#allocation11 + $0x130] sm:$0xff]
          %v1931 = vld [vmem:[#allocation11 + $0x138] sm:$0xff]
          %v1932 = vld [vmem:[#allocation11 + $0x140] sm:$0xff]
          %v1933 = vld [vmem:[#allocation11 + $0x148] sm:$0xff]
          %v1934 = vld [vmem:[#allocation11 + $0x150] sm:$0xff]
          %v1935 = vld [vmem:[#allocation11 + $0x158] sm:$0xff]
          %v1936 = vld [vmem:[#allocation11 + $0x160] sm:$0xff]
          %v1937 = vld [vmem:[#allocation11 + $0x168] sm:$0xff]
          %v1938 = vld [vmem:[#allocation11 + $0x170] sm:$0xff]
          %v1939 = vld [vmem:[#allocation11 + $0x178] sm:$0xff]
          %v1940 = vld [vmem:[#allocation11 + $0x180] sm:$0xff]
          %v1941 = vld [vmem:[#allocation11 + $0x188] sm:$0xff]
          %v1942 = vld [vmem:[#allocation11 + $0x190] sm:$0xff]
          %v1943 = vld [vmem:[#allocation11 + $0x198] sm:$0xff]
          %v1944 = vld [vmem:[#allocation11 + $0x1a0] sm:$0xff]
          %v1945 = vld [vmem:[#allocation11 + $0x1a8] sm:$0xff]
          %v1946 = vld [vmem:[#allocation11 + $0x1b0] sm:$0xff]
          %v1947 = vld [vmem:[#allocation11 + $0x1b8] sm:$0xff]
          %v1948 = vld [vmem:[#allocation11 + $0x1c0] sm:$0xff]
          %v1949 = vld [vmem:[#allocation11 + $0x1c8] sm:$0xff]
          %v1950 = vld [vmem:[#allocation11 + $0x1d0] sm:$0xff]
          %v1951 = vld [vmem:[#allocation11 + $0x1d8] sm:$0xff]
          %v1952 = vld [vmem:[#allocation11 + $0x1e0] sm:$0xff]
          %v1953 = vld [vmem:[#allocation11 + $0x1e8] sm:$0xff]
          %v1954 = vld [vmem:[#allocation11 + $0x1f0] sm:$0xff]
          %v1955 = vld [vmem:[#allocation11 + $0x1f8] sm:$0xff]
          %v1956 = vld [vmem:[%s9] sm:$0x3]
          %v1958 = vlaneseq
          %v1959 = vshrl.u32 %v1958, 7
          %v1960 = vsub.s32 0, %v1959
          %v1961 = vrot.slane %v1956, %v1960
          %v1962 = vlaneseq
          %v1963 = vshrl.u32 %v1962, 7
          %v1964 = vsub.s32 1, %v1963
          %v1965 = vrot.slane %v1956, %v1964
          %v2032 = vunpack.c.l.b16 %v1892
          %v2033 = vunpack.c.h.b16 %v1892
          %v2034 = vunpack.c.l.b16 %v1893
          %v2035 = vunpack.c.h.b16 %v1893
          %v2036 = vunpack.c.l.b16 %v1894
          %v2037 = vunpack.c.h.b16 %v1894
          %v2038 = vunpack.c.l.b16 %v1895
          %v2039 = vunpack.c.h.b16 %v1895
          %v2040 = vunpack.c.l.b16 %v1896
          %v2041 = vunpack.c.h.b16 %v1896
          %v2042 = vunpack.c.l.b16 %v1897
          %v2043 = vunpack.c.h.b16 %v1897
          %v2044 = vunpack.c.l.b16 %v1898
          %v2045 = vunpack.c.h.b16 %v1898
          %v2046 = vunpack.c.l.b16 %v1899
          %v2047 = vunpack.c.h.b16 %v1899
          %v2048 = vunpack.c.l.b16 %v1900
          %v2049 = vunpack.c.h.b16 %v1900
          %v2050 = vunpack.c.l.b16 %v1901
          %v2051 = vunpack.c.h.b16 %v1901
          %v2052 = vunpack.c.l.b16 %v1902
          %v2053 = vunpack.c.h.b16 %v1902
          %v2054 = vunpack.c.l.b16 %v1903
          %v2055 = vunpack.c.h.b16 %v1903
          %v2056 = vunpack.c.l.b16 %v1904
          %v2057 = vunpack.c.h.b16 %v1904
          %v2058 = vunpack.c.l.b16 %v1905
          %v2059 = vunpack.c.h.b16 %v1905
          %v2060 = vunpack.c.l.b16 %v1906
          %v2061 = vunpack.c.h.b16 %v1906
          %v2062 = vunpack.c.l.b16 %v1907
          %v2063 = vunpack.c.h.b16 %v1907
          %v2064 = vunpack.c.l.b16 %v1908
          %v2065 = vunpack.c.h.b16 %v1908
          %v2066 = vunpack.c.l.b16 %v1909
          %v2067 = vunpack.c.h.b16 %v1909
          %v2068 = vunpack.c.l.b16 %v1910
          %v2069 = vunpack.c.h.b16 %v1910
          %v2070 = vunpack.c.l.b16 %v1911
          %v2071 = vunpack.c.h.b16 %v1911
          %v2072 = vunpack.c.l.b16 %v1912
          %v2073 = vunpack.c.h.b16 %v1912
          %v2074 = vunpack.c.l.b16 %v1913
          %v2075 = vunpack.c.h.b16 %v1913
          %v2076 = vunpack.c.l.b16 %v1914
          %v2077 = vunpack.c.h.b16 %v1914
          %v2078 = vunpack.c.l.b16 %v1915
          %v2079 = vunpack.c.h.b16 %v1915
          %v2080 = vunpack.c.l.b16 %v1916
          %v2081 = vunpack.c.h.b16 %v1916
          %v2082 = vunpack.c.l.b16 %v1917
          %v2083 = vunpack.c.h.b16 %v1917
          %v2084 = vunpack.c.l.b16 %v1918
          %v2085 = vunpack.c.h.b16 %v1918
          %v2086 = vunpack.c.l.b16 %v1919
          %v2087 = vunpack.c.h.b16 %v1919
          %v2088 = vunpack.c.l.b16 %v1920
          %v2089 = vunpack.c.h.b16 %v1920
          %v2090 = vunpack.c.l.b16 %v1921
          %v2091 = vunpack.c.h.b16 %v1921
          %v2092 = vunpack.c.l.b16 %v1922
          %v2093 = vunpack.c.h.b16 %v1922
          %v2094 = vunpack.c.l.b16 %v1923
          %v2095 = vunpack.c.h.b16 %v1923
          %v2096 = vunpack.c.l.b16 %v1924
          %v2097 = vunpack.c.h.b16 %v1924
          %v2098 = vunpack.c.l.b16 %v1925
          %v2099 = vunpack.c.h.b16 %v1925
          %v2100 = vunpack.c.l.b16 %v1926
          %v2101 = vunpack.c.h.b16 %v1926
          %v2102 = vunpack.c.l.b16 %v1927
          %v2103 = vunpack.c.h.b16 %v1927
          %v2104 = vunpack.c.l.b16 %v1928
          %v2105 = vunpack.c.h.b16 %v1928
          %v2106 = vunpack.c.l.b16 %v1929
          %v2107 = vunpack.c.h.b16 %v1929
          %v2108 = vunpack.c.l.b16 %v1930
          %v2109 = vunpack.c.h.b16 %v1930
          %v2110 = vunpack.c.l.b16 %v1931
          %v2111 = vunpack.c.h.b16 %v1931
          %v2112 = vunpack.c.l.b16 %v1932
          %v2113 = vunpack.c.h.b16 %v1932
          %v2114 = vunpack.c.l.b16 %v1933
          %v2115 = vunpack.c.h.b16 %v1933
          %v2116 = vunpack.c.l.b16 %v1934
          %v2117 = vunpack.c.h.b16 %v1934
          %v2118 = vunpack.c.l.b16 %v1935
          %v2119 = vunpack.c.h.b16 %v1935
          %v2120 = vunpack.c.l.b16 %v1936
          %v2121 = vunpack.c.h.b16 %v1936
          %v2122 = vunpack.c.l.b16 %v1937
          %v2123 = vunpack.c.h.b16 %v1937
          %v2124 = vunpack.c.l.b16 %v1938
          %v2125 = vunpack.c.h.b16 %v1938
          %v2126 = vunpack.c.l.b16 %v1939
          %v2127 = vunpack.c.h.b16 %v1939
          %v2128 = vunpack.c.l.b16 %v1940
          %v2129 = vunpack.c.h.b16 %v1940
          %v2130 = vunpack.c.l.b16 %v1941
          %v2131 = vunpack.c.h.b16 %v1941
          %v2132 = vunpack.c.l.b16 %v1942
          %v2133 = vunpack.c.h.b16 %v1942
          %v2134 = vunpack.c.l.b16 %v1943
          %v2135 = vunpack.c.h.b16 %v1943
          %v2136 = vunpack.c.l.b16 %v1944
          %v2137 = vunpack.c.h.b16 %v1944
          %v2138 = vunpack.c.l.b16 %v1945
          %v2139 = vunpack.c.h.b16 %v1945
          %v2140 = vunpack.c.l.b16 %v1946
          %v2141 = vunpack.c.h.b16 %v1946
          %v2142 = vunpack.c.l.b16 %v1947
          %v2143 = vunpack.c.h.b16 %v1947
          %v2144 = vunpack.c.l.b16 %v1948
          %v2145 = vunpack.c.h.b16 %v1948
          %v2146 = vunpack.c.l.b16 %v1949
          %v2147 = vunpack.c.h.b16 %v1949
          %v2148 = vunpack.c.l.b16 %v1950
          %v2149 = vunpack.c.h.b16 %v1950
          %v2150 = vunpack.c.l.b16 %v1951
          %v2151 = vunpack.c.h.b16 %v1951
          %v2152 = vunpack.c.l.b16 %v1952
          %v2153 = vunpack.c.h.b16 %v1952
          %v2154 = vunpack.c.l.b16 %v1953
          %v2155 = vunpack.c.h.b16 %v1953
          %v2156 = vunpack.c.l.b16 %v1954
          %v2157 = vunpack.c.h.b16 %v1954
          %v2158 = vunpack.c.l.b16 %v1955
          %v2159 = vunpack.c.h.b16 %v1955
          %v2160 = vpack.c.b16 %v2034, %v2032
          %v2161 = vpack.c.b16 %v2035, %v2033
          %v2162 = vpack.c.b16 %v2038, %v2036
          %v2163 = vpack.c.b16 %v2039, %v2037
          %v2164 = vpack.c.b16 %v2042, %v2040
          %v2165 = vpack.c.b16 %v2043, %v2041
          %v2166 = vpack.c.b16 %v2046, %v2044
          %v2167 = vpack.c.b16 %v2047, %v2045
          %v2168 = vpack.c.b16 %v2050, %v2048
          %v2169 = vpack.c.b16 %v2051, %v2049
          %v2170 = vpack.c.b16 %v2054, %v2052
          %v2171 = vpack.c.b16 %v2055, %v2053
          %v2172 = vpack.c.b16 %v2058, %v2056
          %v2173 = vpack.c.b16 %v2059, %v2057
          %v2174 = vpack.c.b16 %v2062, %v2060
          %v2175 = vpack.c.b16 %v2063, %v2061
          %v2176 = vpack.c.b16 %v2066, %v2064
          %v2177 = vpack.c.b16 %v2067, %v2065
          %v2178 = vpack.c.b16 %v2070, %v2068
          %v2179 = vpack.c.b16 %v2071, %v2069
          %v2180 = vpack.c.b16 %v2074, %v2072
          %v2181 = vpack.c.b16 %v2075, %v2073
          %v2182 = vpack.c.b16 %v2078, %v2076
          %v2183 = vpack.c.b16 %v2079, %v2077
          %v2184 = vpack.c.b16 %v2082, %v2080
          %v2185 = vpack.c.b16 %v2083, %v2081
          %v2186 = vpack.c.b16 %v2086, %v2084
          %v2187 = vpack.c.b16 %v2087, %v2085
          %v2188 = vpack.c.b16 %v2090, %v2088
          %v2189 = vpack.c.b16 %v2091, %v2089
          %v2190 = vpack.c.b16 %v2094, %v2092
          %v2191 = vpack.c.b16 %v2095, %v2093
          %v2192 = vpack.c.b16 %v2098, %v2096
          %v2193 = vpack.c.b16 %v2099, %v2097
          %v2194 = vpack.c.b16 %v2102, %v2100
          %v2195 = vpack.c.b16 %v2103, %v2101
          %v2196 = vpack.c.b16 %v2106, %v2104
          %v2197 = vpack.c.b16 %v2107, %v2105
          %v2198 = vpack.c.b16 %v2110, %v2108
          %v2199 = vpack.c.b16 %v2111, %v2109
          %v2200 = vpack.c.b16 %v2114, %v2112
          %v2201 = vpack.c.b16 %v2115, %v2113
          %v2202 = vpack.c.b16 %v2118, %v2116
          %v2203 = vpack.c.b16 %v2119, %v2117
          %v2204 = vpack.c.b16 %v2122, %v2120
          %v2205 = vpack.c.b16 %v2123, %v2121
          %v2206 = vpack.c.b16 %v2126, %v2124
          %v2207 = vpack.c.b16 %v2127, %v2125
          %v2208 = vpack.c.b16 %v2130, %v2128
          %v2209 = vpack.c.b16 %v2131, %v2129
          %v2210 = vpack.c.b16 %v2134, %v2132
          %v2211 = vpack.c.b16 %v2135, %v2133
          %v2212 = vpack.c.b16 %v2138, %v2136
          %v2213 = vpack.c.b16 %v2139, %v2137
          %v2214 = vpack.c.b16 %v2142, %v2140
          %v2215 = vpack.c.b16 %v2143, %v2141
          %v2216 = vpack.c.b16 %v2146, %v2144
          %v2217 = vpack.c.b16 %v2147, %v2145
          %v2218 = vpack.c.b16 %v2150, %v2148
          %v2219 = vpack.c.b16 %v2151, %v2149
          %v2220 = vpack.c.b16 %v2154, %v2152
          %v2221 = vpack.c.b16 %v2155, %v2153
          %v2222 = vpack.c.b16 %v2158, %v2156
          %v2223 = vpack.c.b16 %v2159, %v2157
          %2288 = vmatprep.subr.bf16.mxu0 %v2175
          %2289 = vmatpush1.bf16.msra.mxu0 %v2174
          %2290 = vmatprep.subr.bf16.mxu0 %v2173
          %2291 = vmatpush1.bf16.msra.mxu0 %v2172
          %2292 = vmatprep.subr.bf16.mxu0 %v2171
          %2293 = vmatpush1.bf16.msra.mxu0 %v2170
          %2294 = vmatprep.subr.bf16.mxu0 %v2169
          %2295 = vmatpush1.bf16.msra.mxu0 %v2168
          %2296 = vmatprep.subr.bf16.mxu0 %v2167
          %2297 = vmatpush1.bf16.msra.mxu0 %v2166
          %2298 = vmatprep.subr.bf16.mxu0 %v2165
          %2299 = vmatpush1.bf16.msra.mxu0 %v2164
          %2300 = vmatprep.subr.bf16.mxu0 %v2163
          %2301 = vmatpush1.bf16.msra.mxu0 %v2162
          %2302 = vmatprep.subr.bf16.mxu0 %v2161
          %2303 = vmatpush1.bf16.msra.mxu0 %v2160
          %2304 = vmatprep.subr.bf16.mxu0 %v2191
          %2305 = vmatpush2.bf16.msra.mxu0 %v2190
          %2306 = vmatprep.subr.bf16.mxu0 %v2189
          %2307 = vmatpush2.bf16.msra.mxu0 %v2188
          %2308 = vmatprep.subr.bf16.mxu0 %v2187
          %2309 = vmatpush2.bf16.msra.mxu0 %v2186
          %2310 = vmatprep.subr.bf16.mxu0 %v2185
          %2311 = vmatpush2.bf16.msra.mxu0 %v2184
          %2312 = vmatprep.subr.bf16.mxu0 %v2183
          %2313 = vmatpush2.bf16.msra.mxu0 %v2182
          %2314 = vmatprep.subr.bf16.mxu0 %v2181
          %2315 = vmatpush2.bf16.msra.mxu0 %v2180
          %2316 = vmatprep.subr.bf16.mxu0 %v2179
          %2317 = vmatpush2.bf16.msra.mxu0 %v2178
          %2318 = vmatprep.subr.bf16.mxu0 %v2177
          %2319 = vmatpush2.bf16.msra.mxu0 %v2176
          %2320 = vmatprep.mubr.bf16.mxu0 %v1889
          %2321 = vmatmul.mubr.bf16.gmra.mxu0 %v1888
          %v2322 = vpop.f32.mrf.mxu0
          %v2323 = vadd.f32 %v1961, %v2322
          %v2324 = vpop.f32.mrf.mxu0
          %v2325 = vadd.f32 %v1965, %v2324
          %v2326 = vpop.f32.mrf.mxu0
          %v2327 = vadd.f32 %v1961, %v2326
          %v2328 = vpop.f32.mrf.mxu0
          %v2329 = vadd.f32 %v1965, %v2328
          %2330 = vdwg.mxu0
          %2331 = vmatprep.subr.bf16.mxu0 %v2207
          %2332 = vmatpush1.bf16.msra.mxu0 %v2206
          %2333 = vmatprep.subr.bf16.mxu0 %v2205
          %2334 = vmatpush1.bf16.msra.mxu0 %v2204
          %2335 = vmatprep.subr.bf16.mxu0 %v2203
          %2336 = vmatpush1.bf16.msra.mxu0 %v2202
          %2337 = vmatprep.subr.bf16.mxu0 %v2201
          %2338 = vmatpush1.bf16.msra.mxu0 %v2200
          %2339 = vmatprep.subr.bf16.mxu0 %v2199
          %2340 = vmatpush1.bf16.msra.mxu0 %v2198
          %2341 = vmatprep.subr.bf16.mxu0 %v2197
          %2342 = vmatpush1.bf16.msra.mxu0 %v2196
          %2343 = vmatprep.subr.bf16.mxu0 %v2195
          %2344 = vmatpush1.bf16.msra.mxu0 %v2194
          %2345 = vmatprep.subr.bf16.mxu0 %v2193
          %2346 = vmatpush1.bf16.msra.mxu0 %v2192
          %2347 = vmatprep.subr.bf16.mxu0 %v2223
          %2348 = vmatpush2.bf16.msra.mxu0 %v2222
          %2349 = vmatprep.subr.bf16.mxu0 %v2221
          %2350 = vmatpush2.bf16.msra.mxu0 %v2220
          %2351 = vmatprep.subr.bf16.mxu0 %v2219
          %2352 = vmatpush2.bf16.msra.mxu0 %v2218
          %2353 = vmatprep.subr.bf16.mxu0 %v2217
          %2354 = vmatpush2.bf16.msra.mxu0 %v2216
          %2355 = vmatprep.subr.bf16.mxu0 %v2215
          %2356 = vmatpush2.bf16.msra.mxu0 %v2214
          %2357 = vmatprep.subr.bf16.mxu0 %v2213
          %2358 = vmatpush2.bf16.msra.mxu0 %v2212
          %2359 = vmatprep.subr.bf16.mxu0 %v2211
          %2360 = vmatpush2.bf16.msra.mxu0 %v2210
          %2361 = vmatprep.subr.bf16.mxu0 %v2209
          %2362 = vmatpush2.bf16.msra.mxu0 %v2208
          %2363 = vmatprep.mubr.bf16.mxu0 %v1891
          %2364 = vmatmul.mubr.bf16.gmra.mxu0 %v1890
          %v2365 = vpop.f32.mrf.mxu0
          %v2366 = vadd.f32 %v2323, %v2365
          %v2367 = vpop.f32.mrf.mxu0
          %v2368 = vadd.f32 %v2325, %v2367
          %v2369 = vpop.f32.mrf.mxu0
          %v2370 = vadd.f32 %v2327, %v2369
          %v2371 = vpop.f32.mrf.mxu0
          %v2372 = vadd.f32 %v2329, %v2371
          %2373 = vdwg.mxu0
          %v2374 = vmax.f32 %v2366, 0.0
          %v2375 = vmax.f32 %v2368, 0.0
          %v2376 = vmax.f32 %v2370, 0.0
          %v2377 = vmax.f32 %v2372, 0.0
          %v2378 = vpack.c.bf16 %v2376, %v2374
          %v2379 = vpack.c.bf16 %v2377, %v2375
          %v2380 = vld [vmem:[#allocation12] sm:$0xf]
          %v2381 = vld [vmem:[#allocation12 + $0x4] sm:$0xf]
          %v2382 = vld [vmem:[#allocation12 + $0x8] sm:$0xf]
          %v2383 = vld [vmem:[#allocation12 + $0xc] sm:$0xf]
          %v2384 = vld [vmem:[#allocation12 + $0x10] sm:$0xf]
          %v2385 = vld [vmem:[#allocation12 + $0x14] sm:$0xf]
          %v2386 = vld [vmem:[#allocation12 + $0x18] sm:$0xf]
          %v2387 = vld [vmem:[#allocation12 + $0x1c] sm:$0xf]
          %v2388 = vld [vmem:[#allocation12 + $0x20] sm:$0xf]
          %v2389 = vld [vmem:[#allocation12 + $0x24] sm:$0xf]
          %v2390 = vld [vmem:[#allocation12 + $0x28] sm:$0xf]
          %v2391 = vld [vmem:[#allocation12 + $0x2c] sm:$0xf]
          %v2392 = vld [vmem:[#allocation12 + $0x30] sm:$0xf]
          %v2393 = vld [vmem:[#allocation12 + $0x34] sm:$0xf]
          %v2394 = vld [vmem:[#allocation12 + $0x38] sm:$0xf]
          %v2395 = vld [vmem:[#allocation12 + $0x3c] sm:$0xf]
          %v2396 = vld [vmem:[#allocation12 + $0x40] sm:$0xf]
          %v2397 = vld [vmem:[#allocation12 + $0x44] sm:$0xf]
          %v2398 = vld [vmem:[#allocation12 + $0x48] sm:$0xf]
          %v2399 = vld [vmem:[#allocation12 + $0x4c] sm:$0xf]
          %v2400 = vld [vmem:[#allocation12 + $0x50] sm:$0xf]
          %v2401 = vld [vmem:[#allocation12 + $0x54] sm:$0xf]
          %v2402 = vld [vmem:[#allocation12 + $0x58] sm:$0xf]
          %v2403 = vld [vmem:[#allocation12 + $0x5c] sm:$0xf]
          %v2404 = vld [vmem:[#allocation12 + $0x60] sm:$0xf]
          %v2405 = vld [vmem:[#allocation12 + $0x64] sm:$0xf]
          %v2406 = vld [vmem:[#allocation12 + $0x68] sm:$0xf]
          %v2407 = vld [vmem:[#allocation12 + $0x6c] sm:$0xf]
          %v2408 = vld [vmem:[#allocation12 + $0x70] sm:$0xf]
          %v2409 = vld [vmem:[#allocation12 + $0x74] sm:$0xf]
          %v2410 = vld [vmem:[#allocation12 + $0x78] sm:$0xf]
          %v2411 = vld [vmem:[#allocation12 + $0x7c] sm:$0xf]
          %v2412 = vld [vmem:[%s11] sm:$0x1]
          %v2414 = vlaneseq
          %v2415 = vshrl.u32 %v2414, 7
          %v2416 = vsub.s32 0, %v2415
          %v2417 = vrot.slane %v2412, %v2416
          %v2451 = vunpack.c.l.b16 %v2380
          %v2452 = vunpack.c.l.b16 %v2381
          %v2453 = vunpack.c.l.b16 %v2382
          %v2454 = vunpack.c.l.b16 %v2383
          %v2455 = vunpack.c.l.b16 %v2384
          %v2456 = vunpack.c.l.b16 %v2385
          %v2457 = vunpack.c.l.b16 %v2386
          %v2458 = vunpack.c.l.b16 %v2387
          %v2459 = vunpack.c.l.b16 %v2388
          %v2460 = vunpack.c.l.b16 %v2389
          %v2461 = vunpack.c.l.b16 %v2390
          %v2462 = vunpack.c.l.b16 %v2391
          %v2463 = vunpack.c.l.b16 %v2392
          %v2464 = vunpack.c.l.b16 %v2393
          %v2465 = vunpack.c.l.b16 %v2394
          %v2466 = vunpack.c.l.b16 %v2395
          %v2467 = vunpack.c.l.b16 %v2396
          %v2468 = vunpack.c.l.b16 %v2397
          %v2469 = vunpack.c.l.b16 %v2398
          %v2470 = vunpack.c.l.b16 %v2399
          %v2471 = vunpack.c.l.b16 %v2400
          %v2472 = vunpack.c.l.b16 %v2401
          %v2473 = vunpack.c.l.b16 %v2402
          %v2474 = vunpack.c.l.b16 %v2403
          %v2475 = vunpack.c.l.b16 %v2404
          %v2476 = vunpack.c.l.b16 %v2405
          %v2477 = vunpack.c.l.b16 %v2406
          %v2478 = vunpack.c.l.b16 %v2407
          %v2479 = vunpack.c.l.b16 %v2408
          %v2480 = vunpack.c.l.b16 %v2409
          %v2481 = vunpack.c.l.b16 %v2410
          %v2482 = vunpack.c.l.b16 %v2411
          %v2483 = vpack.c.b16 %v2452, %v2451
          %v2484 = vpack.c.b16 %v2454, %v2453
          %v2485 = vpack.c.b16 %v2456, %v2455
          %v2486 = vpack.c.b16 %v2458, %v2457
          %v2487 = vpack.c.b16 %v2460, %v2459
          %v2488 = vpack.c.b16 %v2462, %v2461
          %v2489 = vpack.c.b16 %v2464, %v2463
          %v2490 = vpack.c.b16 %v2466, %v2465
          %v2491 = vpack.c.b16 %v2468, %v2467
          %v2492 = vpack.c.b16 %v2470, %v2469
          %v2493 = vpack.c.b16 %v2472, %v2471
          %v2494 = vpack.c.b16 %v2474, %v2473
          %v2495 = vpack.c.b16 %v2476, %v2475
          %v2496 = vpack.c.b16 %v2478, %v2477
          %v2497 = vpack.c.b16 %v2480, %v2479
          %v2498 = vpack.c.b16 %v2482, %v2481
          %2515 = vmatprep.subr.bf16.mxu0 0
          %2516 = vmatpush1.bf16.msra.mxu0 %v2490
          %2517 = vmatprep.subr.bf16.mxu0 0
          %2518 = vmatpush1.bf16.msra.mxu0 %v2489
          %2519 = vmatprep.subr.bf16.mxu0 0
          %2520 = vmatpush1.bf16.msra.mxu0 %v2488
          %2521 = vmatprep.subr.bf16.mxu0 0
          %2522 = vmatpush1.bf16.msra.mxu0 %v2487
          %2523 = vmatprep.subr.bf16.mxu0 0
          %2524 = vmatpush1.bf16.msra.mxu0 %v2486
          %2525 = vmatprep.subr.bf16.mxu0 0
          %2526 = vmatpush1.bf16.msra.mxu0 %v2485
          %2527 = vmatprep.subr.bf16.mxu0 0
          %2528 = vmatpush1.bf16.msra.mxu0 %v2484
          %2529 = vmatprep.subr.bf16.mxu0 0
          %2530 = vmatpush1.bf16.msra.mxu0 %v2483
          %2531 = vmatprep.subr.bf16.mxu0 0
          %2532 = vmatpush2.bf16.msra.mxu0 %v2498
          %2533 = vmatprep.subr.bf16.mxu0 0
          %2534 = vmatpush2.bf16.msra.mxu0 %v2497
          %2535 = vmatprep.subr.bf16.mxu0 0
          %2536 = vmatpush2.bf16.msra.mxu0 %v2496
          %2537 = vmatprep.subr.bf16.mxu0 0
          %2538 = vmatpush2.bf16.msra.mxu0 %v2495
          %2539 = vmatprep.subr.bf16.mxu0 0
          %2540 = vmatpush2.bf16.msra.mxu0 %v2494
          %2541 = vmatprep.subr.bf16.mxu0 0
          %2542 = vmatpush2.bf16.msra.mxu0 %v2493
          %2543 = vmatprep.subr.bf16.mxu0 0
          %2544 = vmatpush2.bf16.msra.mxu0 %v2492
          %2545 = vmatprep.subr.bf16.mxu0 0
          %2546 = vmatpush2.bf16.msra.mxu0 %v2491
          %2547 = vmatprep.mubr.bf16.mxu0 %v2379
          %2548 = vmatmul.mubr.bf16.gmra.mxu0 %v2378
          %v2549 = vpop.f32.mrf.mxu0
          %v2550 = vadd.f32 %v2417, %v2549
          %v2551 = vpop.f32.mrf.mxu0
          %v2552 = vpop.f32.mrf.mxu0
          %v2553 = vadd.f32 %v2417, %v2552
          %v2554 = vpop.f32.mrf.mxu0
          %2555 = vdwg.mxu0
          %2556 = vst [vmem:[#allocation14] sm:$0xff] %v2550
          %2557 = vst [vmem:[#allocation14 + $0x8] sm:$0xff] %v2553
        $region100: #{tpu_custom_call.1} parent=67 // pred_fallthru
          _
        // Predicated region
        $region101: #{tpu_custom_call.1} parent=67 // pred_check
          %p2558 = pneg %p331
        $region102: #{tpu_custom_call.1} parent=67 // pred_check_branch
          %2560 = sbr.rel (%p2558) target = $region104
        $region103: #{tpu_custom_call.1} parent=67 // pred_region
          %s2561 = smul.u32 2, %s36
          %s2563 = ssub.s32 256, 256
          %2564 = vsyncadd [#allocation5], %s2563
          %s2565 = smul.addr %s2561, 128
          %s2566 = scalar_lea.hbm %s12, %s2565
          %s2567 = sshll.u32 [#allocation14], 4
          %s2568 = int_to_ptr.vmem [resolvable:$true] %s2567
          %2573 = dma.vmem_to_hbm [thread:$0]  %s2568, 256, %s2566, [#allocation5], 128, 128, 8
        $region104: #{tpu_custom_call.1} parent=67 // pred_fallthru
          _
        // Predicated region
        $region105: #{tpu_custom_call.1} parent=67 // pred_check
          %p2574 = pneg %p331
        $region106: #{tpu_custom_call.1} parent=67 // pred_check_branch
          %2576 = sbr.rel (%p2574) target = $region108
        $region107: #{tpu_custom_call.1} parent=67 // pred_region
          %2577 = dma.done [#allocation5], 256
        $region108: #{tpu_custom_call.1} parent=67 // pred_fallthru
          _
      $region68: #{tpu_custom_call.1} parent=5 // pred_fallthru
        _
      %p2578 = scmp.le.s32.totalorder 2, %s27
      // Predicated region
      $region109: #{tpu_custom_call.1} parent=5 // pred_check
        %p2579 = pneg %p2578
      $region110: #{tpu_custom_call.1} parent=5 // pred_check_branch
        %2581 = sbr.rel (%p2579) target = $region112
      $region111: #{tpu_custom_call.1} parent=5 // pred_region
        %s2582 = ssub.s32 %s27, 2
      $region112: #{tpu_custom_call.1} parent=5 // pred_fallthru
        _
    $region6: #{tpu_custom_call.1} parent=1 // loop_footer
      %s31 = sadd.s32 1, %s27
    $region7: #{tpu_custom_call.1} parent=1 // loop_footer_branch
      %26 = sbr.rel target = $region3
    $region8: #{tpu_custom_call.1} parent=1 // loop_exit
      _
    %2583 = vsyncpa [#allocation4], 1
    %s2584 = scalar_lea.sflag [#allocation4], 1
    %2585 = vsyncpa %s2584, 1
    %2586 = vsyncpa [#allocation7], 1
    %s2587 = scalar_lea.sflag [#allocation7], 1
    %2588 = vsyncpa %s2587, 1
    %2589 = vsyncpa [#allocation10], 1
    %2590 = vsyncpa [#allocation13], 1
    %2591 = vsyncpa [#allocation5], 1
    %s2592 = scalar_lea.sflag [#allocation5], 1
    %2593 = vsyncpa %s2592, 1

</llo_original>
